<compile_context>
chip_gen: v5e
topology: v5e:2x2
jax: 0.10.0
libtpu: 0.0.40
codegen_flags: <defaults>
</compile_context>

<pallas_src>
import jax
import jax.numpy as jnp
from jax.experimental import pallas as pl
from jax.experimental.pallas import tpu as pltpu

EPS = 0.0  # PyG GINConv default eps (train_eps=False)


def _round_up(v, m):
    return ((v + m - 1) // m) * m


def _pad2(a, rows, cols):
    return jnp.pad(a, ((0, rows - a.shape[0]), (0, cols - a.shape[1])))


def gin_kernel(adj_ref, x_ref, w1_ref, b1_ref, w2_ref, b2_ref, o_ref, acc_ref):
    k = pl.program_id(1)

    @pl.when(k == 0)
    def _():
        acc_ref[...] = jnp.zeros_like(acc_ref)

    # Aggregation (+ self term folded into adj diagonal): acc += adj_tile @ x_tile.
    # adj is bf16 in HBM (halves the dominant O(N^2) stream); casting per tile
    # keeps the matmul / accumulation exact for integer edge counts.
    acc_ref[...] += jnp.dot(
        adj_ref[...].astype(jnp.float32), x_ref[...],
        preferred_element_type=jnp.float32)

    # Finalize: fused MLP epilogue on the accumulated h (never leaves VMEM).
    @pl.when(k == pl.num_programs(1) - 1)
    def _():
        h = acc_ref[...]
        h1 = jnp.dot(h, w1_ref[...], preferred_element_type=jnp.float32) + b1_ref[...]
        # ELU (alpha = 1); clamp before exp so large positives never produce inf.
        h1 = jnp.where(h1 > 0.0, h1, jnp.exp(jnp.minimum(h1, 0.0)) - 1.0)
        out = jnp.dot(h1, w2_ref[...], preferred_element_type=jnp.float32) + b2_ref[...]
        o_ref[...] = out.astype(o_ref.dtype)


def gin_conv(x, edge_index, w1, b1, w2, b2, *, tm=256, tk=512):
    """x: [N, in_ch] f32, edge_index: [2, E] int32 (src, dst). Returns [N, out_ch]."""
    n, in_ch = x.shape
    out_ch = w2.shape[1]

    n_p = _round_up(n, tk)            # tk is a multiple of tm, so tm | n_p too
    cin_p = _round_up(in_ch, 128)     # lane-dense feature axes
    cout_p = _round_up(out_ch, 128)

    # Dense adjacency (glue, not hot path) with the self term folded onto the
    # diagonal: adj[dst, src] = #edges(src -> dst), adj[i, i] += (1 + eps).
    src, dst = edge_index[0], edge_index[1]
    adj = jnp.zeros((n_p, n_p), jnp.float32).at[dst, src].add(1.0)
    diag = jnp.arange(n)
    adj = adj.at[diag, diag].add(1.0 + EPS)
    adj = adj.astype(jnp.bfloat16)    # exact for small integer counts

    x_p = _pad2(x.astype(jnp.float32), n_p, cin_p)
    w1_p = _pad2(w1, cin_p, cout_p)
    w2_p = _pad2(w2, cout_p, cout_p)
    b1_p = _pad2(b1.reshape(1, -1), 1, cout_p)
    b2_p = _pad2(b2.reshape(1, -1), 1, cout_p)

    grid = (n_p // tm, n_p // tk)

    cost = pl.CostEstimate(
        flops=2 * n_p * n_p * cin_p
              + 2 * n_p * cin_p * cout_p
              + 2 * n_p * cout_p * cout_p,
        transcendentals=n_p * cout_p,
        bytes_accessed=n_p * n_p * 2                 # bf16 adjacency
                       + n_p * cin_p * 4             # x
                       + n_p * cout_p * 4            # out
                       + (cin_p + cout_p + 2) * cout_p * 4,   # weights/biases
    )

    out = pl.pallas_call(
        gin_kernel,
        out_shape=jax.ShapeDtypeStruct((n_p, cout_p), jnp.float32),
        grid_spec=pltpu.PrefetchScalarGridSpec(
            num_scalar_prefetch=0,
            grid=grid,
            in_specs=[
                pl.BlockSpec((tm, tk), lambda i, k: (i, k)),          # adj tile
                pl.BlockSpec((tk, cin_p), lambda i, k: (k, 0)),       # x row block
                pl.BlockSpec((cin_p, cout_p), lambda i, k: (0, 0)),   # w1 (resident)
                pl.BlockSpec((1, cout_p), lambda i, k: (0, 0)),       # b1 (resident)
                pl.BlockSpec((cout_p, cout_p), lambda i, k: (0, 0)),  # w2 (resident)
                pl.BlockSpec((1, cout_p), lambda i, k: (0, 0)),       # b2 (resident)
            ],
            out_specs=pl.BlockSpec((tm, cout_p), lambda i, k: (i, 0)),
            scratch_shapes=[pltpu.VMEM((tm, cin_p), jnp.float32)],    # f32 accumulator
        ),
        compiler_params=pltpu.CompilerParams(
            dimension_semantics=("parallel", "arbitrary"),
            vmem_limit_bytes=32 * 1024 * 1024,
        ),
        cost_estimate=cost,
    )(adj, x_p, w1_p, b1_p, w2_p, b2_p)

    return out[:n, :out_ch]


def gin_conv_ref(x, edge_index, w1, b1, w2, b2):
    """Pure-JAX reference for correctness checking."""
    src, dst = edge_index[0], edge_index[1]
    aggr = jnp.zeros_like(x).at[dst].add(x[src])
    h = (1.0 + EPS) * x + aggr
    h1 = jax.nn.elu(h @ w1 + b1)
    return h1 @ w2 + b2


if __name__ == "__main__":
    N = 16          # number of nodes
    E = 40          # number of edges
    IN_CH = 8
    OUT_CH = 32

    key = jax.random.PRNGKey(0)
    k_x, k_e, k_w1, k_b1, k_w2, k_b2 = jax.random.split(key, 6)

    x = jax.random.normal(k_x, (N, IN_CH), dtype=jnp.float32)
    edge_index = jax.random.randint(k_e, (2, E), 0, N, dtype=jnp.int32)

    # "Linear" parameters, stored already transposed: [in, out].
    w1 = jax.random.normal(k_w1, (IN_CH, OUT_CH), dtype=jnp.float32) * 0.1
    b1 = jax.random.normal(k_b1, (OUT_CH,), dtype=jnp.float32) * 0.1
    w2 = jax.random.normal(k_w2, (OUT_CH, OUT_CH), dtype=jnp.float32) * 0.1
    b2 = jax.random.normal(k_b2, (OUT_CH,), dtype=jnp.float32) * 0.1

    out = gin_conv(x, edge_index, w1, b1, w2, b2)
    out = jax.block_until_ready(out)

    ref = gin_conv_ref(x, edge_index, w1, b1, w2, b2)
    assert out.shape == (N, OUT_CH)
    assert jnp.allclose(out, ref, atol=1e-3, rtol=1e-3), "mismatch vs reference"

    print("KERNEL_OK")
</pallas_src>

<mosaic_0001>
module attributes {stable_mosaic.version = 11 : i64} {
  func.func @gin_kernel(%arg0: i32, %arg1: i32, %arg2: memref<256x512xbf16, #tpu.memory_space<vmem>>, %arg3: memref<512x128xf32, #tpu.memory_space<vmem>>, %arg4: memref<128x128xf32, #tpu.memory_space<vmem>>, %arg5: memref<1x128xf32, #tpu.memory_space<vmem>>, %arg6: memref<128x128xf32, #tpu.memory_space<vmem>>, %arg7: memref<1x128xf32, #tpu.memory_space<vmem>>, %arg8: memref<256x128xf32, #tpu.memory_space<vmem>>, %arg9: memref<256x128xf32, #tpu.memory_space<vmem>>) attributes {dimension_semantics = [#tpu.dimension_semantics<parallel>, #tpu.dimension_semantics<arbitrary>], iteration_bounds = array<i64: 2, 1>, scalar_prefetch = 0 : i64, scratch_operands = 1 : i64, tpu.core_type = #tpu.core_type<tc>, window_params = [{transform_indices = @transform_0, window_bounds = array<i64: 256, 512>}, {transform_indices = @transform_1, window_bounds = array<i64: 512, 128>}, {pipeline_mode = #tpu.pipeline_mode<synchronous>, transform_indices = @transform_2, window_bounds = array<i64: 128, 128>}, {pipeline_mode = #tpu.pipeline_mode<synchronous>, transform_indices = @transform_3, window_bounds = array<i64: 1, 128>}, {pipeline_mode = #tpu.pipeline_mode<synchronous>, transform_indices = @transform_4, window_bounds = array<i64: 128, 128>}, {pipeline_mode = #tpu.pipeline_mode<synchronous>, transform_indices = @transform_5, window_bounds = array<i64: 1, 128>}, {transform_indices = @transform_6, window_bounds = array<i64: 256, 128>}]} {
    %c0_i32 = arith.constant 0 : i32
    %0 = arith.cmpi eq, %arg1, %c0_i32 : i32
    %1 = arith.extui %0 : i1 to i32
    %c0_i32_0 = arith.constant 0 : i32
    %2 = arith.cmpi ne, %1, %c0_i32_0 : i32
    scf.if %2 {
      %cst_10 = arith.constant 0.000000e+00 : f32
      %13 = vector.broadcast %cst_10 : f32 to vector<256x128xf32>
      %c0_11 = arith.constant 0 : index
      %c0_12 = arith.constant 0 : index
      %14 = vector.load %arg9[%c0_11, %c0_12] : memref<256x128xf32, #tpu.memory_space<vmem>>, vector<256x128xf32>
      tpu.vector_store %arg9[%c0_11, %c0_12], %13 {strides = array<i32>} : memref<256x128xf32, #tpu.memory_space<vmem>>, vector<256x128xf32>,
    } else {
    }
    %c0 = arith.constant 0 : index
    %c0_1 = arith.constant 0 : index
    %3 = vector.load %arg9[%c0, %c0_1] : memref<256x128xf32, #tpu.memory_space<vmem>>, vector<256x128xf32>
    %c0_2 = arith.constant 0 : index
    %c0_3 = arith.constant 0 : index
    %4 = vector.load %arg2[%c0_2, %c0_3] : memref<256x512xbf16, #tpu.memory_space<vmem>>, vector<256x512xbf16>
    %5 = arith.extf %4 : vector<256x512xbf16> to vector<256x512xf32>
    %c0_4 = arith.constant 0 : index
    %c0_5 = arith.constant 0 : index
    %6 = vector.load %arg3[%c0_4, %c0_5] : memref<512x128xf32, #tpu.memory_space<vmem>>, vector<512x128xf32>
    %cst = arith.constant dense<0.000000e+00> : vector<256x128xf32>
    %7 = tpu.matmul %5, %6, %cst {dimension_numbers = #tpu.dot_dimension_numbers<[1], [0], [0], [1], [0, 0, 1, 1], [], []>} : vector<256x512xf32>, vector<512x128xf32>, vector<256x128xf32> -> vector<256x128xf32>
    %8 = arith.addf %3, %7 : vector<256x128xf32>
    %c0_6 = arith.constant 0 : index
    %c0_7 = arith.constant 0 : index
    %9 = vector.load %arg9[%c0_6, %c0_7] : memref<256x128xf32, #tpu.memory_space<vmem>>, vector<256x128xf32>
    tpu.vector_store %arg9[%c0_6, %c0_7], %8 {strides = array<i32>} : memref<256x128xf32, #tpu.memory_space<vmem>>, vector<256x128xf32>,
    %c0_i32_8 = arith.constant 0 : i32
    %10 = arith.cmpi eq, %arg1, %c0_i32_8 : i32
    %11 = arith.extui %10 : i1 to i32
    %c0_i32_9 = arith.constant 0 : i32
    %12 = arith.cmpi ne, %11, %c0_i32_9 : i32
    scf.if %12 {
      %c0_10 = arith.constant 0 : index
      %c0_11 = arith.constant 0 : index
      %13 = vector.load %arg9[%c0_10, %c0_11] : memref<256x128xf32, #tpu.memory_space<vmem>>, vector<256x128xf32>
      %c0_12 = arith.constant 0 : index
      %c0_13 = arith.constant 0 : index
      %14 = vector.load %arg4[%c0_12, %c0_13] : memref<128x128xf32, #tpu.memory_space<vmem>>, vector<128x128xf32>
      %cst_14 = arith.constant dense<0.000000e+00> : vector<256x128xf32>
      %15 = tpu.matmul %13, %14, %cst_14 {dimension_numbers = #tpu.dot_dimension_numbers<[1], [0], [0], [1], [0, 0, 1, 1], [], []>} : vector<256x128xf32>, vector<128x128xf32>, vector<256x128xf32> -> vector<256x128xf32>
      %c0_15 = arith.constant 0 : index
      %c0_16 = arith.constant 0 : index
      %16 = vector.load %arg5[%c0_15, %c0_16] : memref<1x128xf32, #tpu.memory_space<vmem>>, vector<1x128xf32>
      %17 = vector.broadcast %16 : vector<1x128xf32> to vector<256x128xf32>
      %18 = arith.addf %15, %17 : vector<256x128xf32>
      %cst_17 = arith.constant 0.000000e+00 : f32
      %19 = vector.broadcast %cst_17 : f32 to vector<256x128xf32>
      %20 = arith.cmpf ogt, %18, %19 : vector<256x128xf32>
      %cst_18 = arith.constant 0.000000e+00 : f32
      %21 = vector.broadcast %cst_18 : f32 to vector<256x128xf32>
      %22 = arith.minimumf %18, %21 : vector<256x128xf32>
      %23 = math.exp %22 : vector<256x128xf32>
      %cst_19 = arith.constant 1.000000e+00 : f32
      %24 = vector.broadcast %cst_19 : f32 to vector<256x128xf32>
      %25 = arith.subf %23, %24 : vector<256x128xf32>
      %26 = arith.select %20, %18, %25 : vector<256x128xi1>, vector<256x128xf32>
      %c0_20 = arith.constant 0 : index
      %c0_21 = arith.constant 0 : index
      %27 = vector.load %arg6[%c0_20, %c0_21] : memref<128x128xf32, #tpu.memory_space<vmem>>, vector<128x128xf32>
      %cst_22 = arith.constant dense<0.000000e+00> : vector<256x128xf32>
      %28 = tpu.matmul %26, %27, %cst_22 {dimension_numbers = #tpu.dot_dimension_numbers<[1], [0], [0], [1], [0, 0, 1, 1], [], []>} : vector<256x128xf32>, vector<128x128xf32>, vector<256x128xf32> -> vector<256x128xf32>
      %c0_23 = arith.constant 0 : index
      %c0_24 = arith.constant 0 : index
      %29 = vector.load %arg7[%c0_23, %c0_24] : memref<1x128xf32, #tpu.memory_space<vmem>>, vector<1x128xf32>
      %30 = vector.broadcast %29 : vector<1x128xf32> to vector<256x128xf32>
      %31 = arith.addf %28, %30 : vector<256x128xf32>
      %c0_25 = arith.constant 0 : index
      %c0_26 = arith.constant 0 : index
      %32 = vector.load %arg8[%c0_25, %c0_26] : memref<256x128xf32, #tpu.memory_space<vmem>>, vector<256x128xf32>
      tpu.vector_store %arg8[%c0_25, %c0_26], %31 {strides = array<i32>} : memref<256x128xf32, #tpu.memory_space<vmem>>, vector<256x128xf32>,
    } else {
    }
    return
  }
  func.func @transform_0(%arg0: i32, %arg1: i32) -> (i32, i32) {
    %c0_i32 = arith.constant 0 : i32
    return %arg0, %arg1 : i32, i32
  }
  func.func @transform_1(%arg0: i32, %arg1: i32) -> (i32, i32) {
    %c0_i32 = arith.constant 0 : i32
    %c0_i32_0 = arith.constant 0 : i32
    return %arg1, %c0_i32 : i32, i32
  }
  func.func @transform_2(%arg0: i32, %arg1: i32) -> (i32, i32) {
    %c0_i32 = arith.constant 0 : i32
    %c0_i32_0 = arith.constant 0 : i32
    %c0_i32_1 = arith.constant 0 : i32
    return %c0_i32, %c0_i32_0 : i32, i32
  }
  func.func @transform_3(%arg0: i32, %arg1: i32) -> (i32, i32) {
    %c0_i32 = arith.constant 0 : i32
    %c0_i32_0 = arith.constant 0 : i32
    %c0_i32_1 = arith.constant 0 : i32
    return %c0_i32, %c0_i32_0 : i32, i32
  }
  func.func @transform_4(%arg0: i32, %arg1: i32) -> (i32, i32) {
    %c0_i32 = arith.constant 0 : i32
    %c0_i32_0 = arith.constant 0 : i32
    %c0_i32_1 = arith.constant 0 : i32
    return %c0_i32, %c0_i32_0 : i32, i32
  }
  func.func @transform_5(%arg0: i32, %arg1: i32) -> (i32, i32) {
    %c0_i32 = arith.constant 0 : i32
    %c0_i32_0 = arith.constant 0 : i32
    %c0_i32_1 = arith.constant 0 : i32
    return %c0_i32, %c0_i32_0 : i32, i32
  }
  func.func @transform_6(%arg0: i32, %arg1: i32) -> (i32, i32) {
    %c0_i32 = arith.constant 0 : i32
    %c0_i32_0 = arith.constant 0 : i32
    return %arg0, %c0_i32 : i32, i32
  }
}

</mosaic_0001>

<llo_original>
// kernel: tpu_custom_call.1
$region0: #{tpu_custom_call.1}
  #allocation0 [shape = 'u32[]', space=smem, size = 0x4, offset = 0x4, fixed_abs, tag = 'smem constant byte address 0x4 - core index']
  #allocation1 [shape = 'u32[72,128]{1,0:T(1,128)}', space=vmem, size = 0x9000, scoped, tag = 'internal scratch']
  #allocation2 [shape = 'f32[256,128]{1,0:T(8,128)}', space=vmem, size = 0x20000, scoped, tag = 'scratch operand']
  %s0 = inlined_call_operand.hbm [shape: bf16[512,512], index: 0, kind: input, shape index: {}]
  %s1 = inlined_call_operand.hbm [shape: f32[512,128], index: 1, kind: input, shape index: {}]
  %s2 = inlined_call_operand.hbm [shape: f32[128,128], index: 2, kind: input, shape index: {}]
  %s3 = inlined_call_operand.vmem [shape: f32[1,128], index: 3, kind: input, shape index: {}]
  %s4 = inlined_call_operand.hbm [shape: f32[128,128], index: 4, kind: input, shape index: {}]
  %s5 = inlined_call_operand.vmem [shape: f32[1,128], index: 5, kind: input, shape index: {}]
  %s6 = inlined_call_operand.hbm [shape: f32[512,128], index: 6, kind: output, shape index: {}]
  %s7 = sld [smem:[#allocation0]]
  $region81: #{tpu_custom_call.1} parent=0
    _
  %s9 = ssub.s32 1, %s7
  %s10 = scalar_select 0, %s9, %s7
  $region1: #{tpu_custom_call.1} parent=0
    #allocation3 [shape = 'u8[524288]{0}', space=vmem, size = 0x80000, scoped, tag = 'input window, operand 0']
    #allocation4 [shape = 's32[2]{0}', space=sflag, size = 0x8, scoped, tag = 'scoped memory for tpu_custom_call.1']
    #allocation5 [shape = 's32[2]{0}', space=sflag, size = 0x8, scoped, tag = 'scoped memory for tpu_custom_call.1']
    #allocation6 [shape = 'u8[262144]{0}', space=vmem, size = 0x40000, scoped, tag = 'input window, operand 1, single buffered']
    #allocation7 [shape = 's32[1]{0}', space=sflag, size = 0x4, scoped, tag = 'scoped memory for tpu_custom_call.1']
    #allocation8 [shape = 'u8[65536]{0}', space=vmem, size = 0x10000, scoped, tag = 'input window, operand 2, single buffered']
    #allocation9 [shape = 'u8[65536]{0}', space=vmem, size = 0x10000, scoped, tag = 'input window, operand 4, single buffered']
    #allocation10 [shape = 's32[1]{0}', space=sflag, size = 0x4, scoped, tag = 'scoped memory for tpu_custom_call.1']
    #allocation11 [shape = 'u8[262144]{0}', space=vmem, size = 0x40000, scoped, tag = 'output window, operand 0']
    %11 = vsyncpa [#allocation4], 0
    %s12 = scalar_lea.sflag [#allocation4], 1
    %13 = vsyncpa %s12, 0
    %14 = vsyncpa [#allocation7], 0
    %15 = vsyncpa [#allocation10], 0
    %16 = vsyncpa [#allocation5], 0
    %s17 = scalar_lea.sflag [#allocation5], 1
    %18 = vsyncpa %s17, 0
    loop: start=0, step=1, limit=4
    $region2: #{tpu_custom_call.1} parent=1 // loop_pre_header
      _
    $region3: #{tpu_custom_call.1} parent=1 // loop_header
      %s20 = sphi 0, %s24
      %p21 = scmp.ge.s32.totalorder %s20, 4
      %s27 = sphi 0, %s39
      %s28 = sphi 0, %s35
      %s29 = sphi 0, %s27
      %s30 = sphi 0, %s28
      %s31 = sphi 0, %s29
      %s32 = sphi 0, %s30
      %s44 = sphi 0, %s46
      %s47 = sphi 0, %s44
      %s48 = sphi 0, %s47
      %s64 = sphi 0, %s48
      %s70 = sphi 0, %s72
      %s73 = sphi 0, %s70
      %s74 = sphi 0, %s73
      %s90 = sphi 0, %s74
      %s94 = sphi 0, %s94
      %s96 = sphi 0, %s94
      %s97 = sphi 0, %s96
      %s111 = sphi 0, %s97
      %s115 = sphi 0, %s115
      %s117 = sphi 0, %s115
      %s118 = sphi 0, %s117
      %s132 = sphi 0, %s118
      %s136 = sphi 0, %s136
      %s138 = sphi 0, %s136
      %s139 = sphi 0, %s138
      %s153 = sphi 0, %s139
      %s157 = sphi 0, %s157
      %s159 = sphi 0, %s157
      %s160 = sphi 0, %s159
      %s174 = sphi 0, %s160
      %s180 = sphi 0, %s182
      %s183 = sphi 0, %s180
      %s184 = sphi 0, %s183
      %s200 = sphi 0, %s184
    $region4: #{tpu_custom_call.1} parent=1 // loop_header_branch
      %23 = sbr.rel (%p21) target = $region8
    $region5: #{tpu_custom_call.1} parent=1 // loop_body
      %s25 = ssub.s32 %s20, 1
      %s26 = ssub.s32 %s20, 2
      %s33 = sadd.s32 1, %s28
      %p34 = scmp.ge.s32.totalorder %s33, 1
      %s35 = scalar_select %p34, 0, %s33
      %s36 = sadd.s32 1, %s27
      %s37 = scalar_select %p34, %s36, %s27
      %p38 = scmp.ge.s32.totalorder %s37, 2
      %s39 = scalar_select %p38, 0, %s37
      %s40 = ssub.s32 %s27, %s39
      %s41 = ssub.s32 %s28, %s35
      %s42 = sor.u32 %s40, %s41
      %p43 = scmp.eq.s32.totalorder %s42, 0
      %s45 = sadd.s32 %s44, 1
      %s46 = scalar_select %p43, %s44, %s45
      %p49 = pneg %p43
      %p50 = scmp.eq.s32.totalorder %s20, 1
      %p51 = por %p49, %p50
      %p52 = scmp.ne.s32.totalorder %s44, %s47
      %p53 = scmp.eq.s32.totalorder %s20, 0
      %p54 = por %p52, %p53
      %p55 = scmp.ne.s32.totalorder %s44, %s47
      %p56 = scmp.eq.s32.totalorder %s25, 1
      %p57 = por %p55, %p56
      %p58 = scmp.ne.s32.totalorder %s47, %s48
      %p59 = scmp.eq.s32.totalorder %s25, 0
      %p60 = por %p58, %p59
      %p61 = scmp.ne.s32.totalorder %s47, %s48
      %p62 = scmp.eq.s32.totalorder %s26, 1
      %p63 = por %p61, %p62
      %p65 = scmp.ne.s32.totalorder %s48, %s64
      %p66 = scmp.eq.s32.totalorder %s26, 0
      %p67 = por %p65, %p66
      %s68 = ssub.s32 %s28, %s35
      %p69 = scmp.eq.s32.totalorder %s68, 0
      %s71 = sadd.s32 %s70, 1
      %s72 = scalar_select %p69, %s70, %s71
      %p75 = pneg %p69
      %p76 = scmp.eq.s32.totalorder %s20, 1
      %p77 = por %p75, %p76
      %p78 = scmp.ne.s32.totalorder %s70, %s73
      %p79 = scmp.eq.s32.totalorder %s20, 0
      %p80 = por %p78, %p79
      %p81 = scmp.ne.s32.totalorder %s70, %s73
      %p82 = scmp.eq.s32.totalorder %s25, 1
      %p83 = por %p81, %p82
      %p84 = scmp.ne.s32.totalorder %s73, %s74
      %p85 = scmp.eq.s32.totalorder %s25, 0
      %p86 = por %p84, %p85
      %p87 = scmp.ne.s32.totalorder %s73, %s74
      %p88 = scmp.eq.s32.totalorder %s26, 1
      %p89 = por %p87, %p88
      %p91 = scmp.ne.s32.totalorder %s74, %s90
      %p92 = scmp.eq.s32.totalorder %s26, 0
      %p93 = por %p91, %p92
      %s95 = sadd.s32 %s94, 1
      %p98 = scmp.eq.s32.totalorder %s20, 1
      %p99 = scmp.ne.s32.totalorder %s94, %s96
      %p100 = scmp.eq.s32.totalorder %s20, 0
      %p101 = por %p99, %p100
      %p102 = scmp.ne.s32.totalorder %s94, %s96
      %p103 = scmp.eq.s32.totalorder %s25, 1
      %p104 = por %p102, %p103
      %p105 = scmp.ne.s32.totalorder %s96, %s97
      %p106 = scmp.eq.s32.totalorder %s25, 0
      %p107 = por %p105, %p106
      %p108 = scmp.ne.s32.totalorder %s96, %s97
      %p109 = scmp.eq.s32.totalorder %s26, 1
      %p110 = por %p108, %p109
      %p112 = scmp.ne.s32.totalorder %s97, %s111
      %p113 = scmp.eq.s32.totalorder %s26, 0
      %p114 = por %p112, %p113
      %s116 = sadd.s32 %s115, 1
      %p119 = scmp.eq.s32.totalorder %s20, 1
      %p120 = scmp.ne.s32.totalorder %s115, %s117
      %p121 = scmp.eq.s32.totalorder %s20, 0
      %p122 = por %p120, %p121
      %p123 = scmp.ne.s32.totalorder %s115, %s117
      %p124 = scmp.eq.s32.totalorder %s25, 1
      %p125 = por %p123, %p124
      %p126 = scmp.ne.s32.totalorder %s117, %s118
      %p127 = scmp.eq.s32.totalorder %s25, 0
      %p128 = por %p126, %p127
      %p129 = scmp.ne.s32.totalorder %s117, %s118
      %p130 = scmp.eq.s32.totalorder %s26, 1
      %p131 = por %p129, %p130
      %p133 = scmp.ne.s32.totalorder %s118, %s132
      %p134 = scmp.eq.s32.totalorder %s26, 0
      %p135 = por %p133, %p134
      %s137 = sadd.s32 %s136, 1
      %p140 = scmp.eq.s32.totalorder %s20, 1
      %p141 = scmp.ne.s32.totalorder %s136, %s138
      %p142 = scmp.eq.s32.totalorder %s20, 0
      %p143 = por %p141, %p142
      %p144 = scmp.ne.s32.totalorder %s136, %s138
      %p145 = scmp.eq.s32.totalorder %s25, 1
      %p146 = por %p144, %p145
      %p147 = scmp.ne.s32.totalorder %s138, %s139
      %p148 = scmp.eq.s32.totalorder %s25, 0
      %p149 = por %p147, %p148
      %p150 = scmp.ne.s32.totalorder %s138, %s139
      %p151 = scmp.eq.s32.totalorder %s26, 1
      %p152 = por %p150, %p151
      %p154 = scmp.ne.s32.totalorder %s139, %s153
      %p155 = scmp.eq.s32.totalorder %s26, 0
      %p156 = por %p154, %p155
      %s158 = sadd.s32 %s157, 1
      %p161 = scmp.eq.s32.totalorder %s20, 1
      %p162 = scmp.ne.s32.totalorder %s157, %s159
      %p163 = scmp.eq.s32.totalorder %s20, 0
      %p164 = por %p162, %p163
      %p165 = scmp.ne.s32.totalorder %s157, %s159
      %p166 = scmp.eq.s32.totalorder %s25, 1
      %p167 = por %p165, %p166
      %p168 = scmp.ne.s32.totalorder %s159, %s160
      %p169 = scmp.eq.s32.totalorder %s25, 0
      %p170 = por %p168, %p169
      %p171 = scmp.ne.s32.totalorder %s159, %s160
      %p172 = scmp.eq.s32.totalorder %s26, 1
      %p173 = por %p171, %p172
      %p175 = scmp.ne.s32.totalorder %s160, %s174
      %p176 = scmp.eq.s32.totalorder %s26, 0
      %p177 = por %p175, %p176
      %s178 = ssub.s32 %s27, %s39
      %p179 = scmp.eq.s32.totalorder %s178, 0
      %s181 = sadd.s32 %s180, 1
      %s182 = scalar_select %p179, %s180, %s181
      %p185 = pneg %p179
      %p186 = scmp.eq.s32.totalorder %s20, 1
      %p187 = por %p185, %p186
      %p188 = scmp.ne.s32.totalorder %s180, %s183
      %p189 = scmp.eq.s32.totalorder %s20, 0
      %p190 = por %p188, %p189
      %p191 = scmp.ne.s32.totalorder %s180, %s183
      %p192 = scmp.eq.s32.totalorder %s25, 1
      %p193 = por %p191, %p192
      %p194 = scmp.ne.s32.totalorder %s183, %s184
      %p195 = scmp.eq.s32.totalorder %s25, 0
      %p196 = por %p194, %p195
      %p197 = scmp.ne.s32.totalorder %s183, %s184
      %p198 = scmp.eq.s32.totalorder %s26, 1
      %p199 = por %p197, %p198
      %p201 = scmp.ne.s32.totalorder %s184, %s200
      %p202 = scmp.eq.s32.totalorder %s26, 0
      %p203 = por %p201, %p202
      %p204 = scmp.le.s32.totalorder 1, %s20
      %p205 = scmp.lt.s32.totalorder %s20, 3
      %p206 = pnand %p204, %p205
      %p207 = pneg %p206
      // Predicated region
      $region9: #{tpu_custom_call.1} parent=5 // pred_check
        _
      $region10: #{tpu_custom_call.1} parent=5 // pred_check_branch
        %209 = sbr.rel (%p206) target = $region12
      $region11: #{tpu_custom_call.1} parent=5 // pred_region
        %s210 = ssub.s32 %s20, 1
        // Predicated region
        $region13: #{tpu_custom_call.1} parent=11 // pred_check
          %p211 = pneg %p86
        $region14: #{tpu_custom_call.1} parent=11 // pred_check_branch
          %213 = sbr.rel (%p211) target = $region16
        $region15: #{tpu_custom_call.1} parent=11 // pred_region
          %s214 = smul.u32 64, %s30
          %216 = vsyncadd [#allocation7], 0
          %s217 = smul.addr %s214, 8
          %s218 = scalar_lea.hbm %s1, %s217
          %s219 = sshll.u32 %s218, 4
          %s220 = int_to_ptr.hbm [resolvable:$true] %s219
          %s221 = sshll.u32 [#allocation6], 4
          %s222 = int_to_ptr.vmem [resolvable:$true] %s221
          %227 = dma.hbm_to_vmem [thread:$0]  %s220, 8192, %s222, [#allocation7], 128, 128, 8
        $region16: #{tpu_custom_call.1} parent=11 // pred_fallthru
          _
        // Predicated region
        $region17: #{tpu_custom_call.1} parent=11 // pred_check
          %p228 = pneg %p107
        $region18: #{tpu_custom_call.1} parent=11 // pred_check_branch
          %230 = sbr.rel (%p228) target = $region20
        $region19: #{tpu_custom_call.1} parent=11 // pred_region
          %232 = vsyncadd [#allocation7], 0
          %s233 = sshll.u32 %s2, 4
          %s234 = int_to_ptr.hbm [resolvable:$true] %s233
          %s235 = sshll.u32 [#allocation8], 4
          %s236 = int_to_ptr.vmem [resolvable:$true] %s235
          %241 = dma.hbm_to_vmem [thread:$0]  %s234, 2048, %s236, [#allocation7], 128, 128, 8
        $region20: #{tpu_custom_call.1} parent=11 // pred_fallthru
          _
        // Predicated region
        $region21: #{tpu_custom_call.1} parent=11 // pred_check
          %p242 = pneg %p128
        $region22: #{tpu_custom_call.1} parent=11 // pred_check_branch
          %244 = sbr.rel (%p242) target = $region24
        $region23: #{tpu_custom_call.1} parent=11 // pred_region
          _
        $region24: #{tpu_custom_call.1} parent=11 // pred_fallthru
          _
        // Predicated region
        $region25: #{tpu_custom_call.1} parent=11 // pred_check
          %p245 = pneg %p149
        $region26: #{tpu_custom_call.1} parent=11 // pred_check_branch
          %247 = sbr.rel (%p245) target = $region28
        $region27: #{tpu_custom_call.1} parent=11 // pred_region
          %249 = vsyncadd [#allocation10], 0
          %s250 = sshll.u32 %s4, 4
          %s251 = int_to_ptr.hbm [resolvable:$true] %s250
          %s252 = sshll.u32 [#allocation9], 4
          %s253 = int_to_ptr.vmem [resolvable:$true] %s252
          %258 = dma.hbm_to_vmem [thread:$0]  %s251, 2048, %s253, [#allocation10], 128, 128, 8
        $region28: #{tpu_custom_call.1} parent=11 // pred_fallthru
          _
        // Predicated region
        $region29: #{tpu_custom_call.1} parent=11 // pred_check
          %p259 = pneg %p170
        $region30: #{tpu_custom_call.1} parent=11 // pred_check_branch
          %261 = sbr.rel (%p259) target = $region32
        $region31: #{tpu_custom_call.1} parent=11 // pred_region
          _
        $region32: #{tpu_custom_call.1} parent=11 // pred_fallthru
          _
      $region12: #{tpu_custom_call.1} parent=5 // pred_fallthru
        _
      %p262 = scmp.lt.s32.totalorder %s20, 2
      // Predicated region
      $region33: #{tpu_custom_call.1} parent=5 // pred_check
        %p263 = pneg %p262
      $region34: #{tpu_custom_call.1} parent=5 // pred_check_branch
        %265 = sbr.rel (%p263) target = $region36
      $region35: #{tpu_custom_call.1} parent=5 // pred_region
        // Predicated region
        $region37: #{tpu_custom_call.1} parent=35 // pred_check
          %p266 = pneg %p54
        $region38: #{tpu_custom_call.1} parent=35 // pred_check_branch
          %268 = sbr.rel (%p266) target = $region40
        $region39: #{tpu_custom_call.1} parent=35 // pred_region
          %s269 = sand.u32 %s44, 1
          %s270 = scalar_lea.sflag [#allocation4], %s269
          %s271 = sand.u32 %s44, 1
          %s272 = smul.addr %s271, 512
          %s273 = scalar_lea.vmem [#allocation3], %s272
          %s274 = smul.u32 32, %s27
          %s275 = smul.u32 4, %s28
          %277 = vsyncadd %s270, 0
          %s278 = smul.addr %s274, 4
          %s279 = sadd.s32 %s275, %s278
          %s280 = smul.addr %s279, 4
          %s281 = scalar_lea.hbm %s0, %s280
          %s282 = sshll.u32 %s281, 4
          %s283 = int_to_ptr.hbm [resolvable:$true] %s282
          %s284 = sshll.u32 %s273, 4
          %s285 = int_to_ptr.vmem [resolvable:$true] %s284
          %290 = dma.hbm_to_vmem [thread:$0]  %s283, 8192, %s285, %s270, 256, 256, 16
        $region40: #{tpu_custom_call.1} parent=35 // pred_fallthru
          _
      $region36: #{tpu_custom_call.1} parent=5 // pred_fallthru
        _
      %p291 = scmp.le.s32.totalorder 1, %s20
      %p292 = scmp.lt.s32.totalorder %s20, 3
      %p293 = pnand %p291, %p292
      %p294 = pneg %p293
      // Predicated region
      $region41: #{tpu_custom_call.1} parent=5 // pred_check
        _
      $region42: #{tpu_custom_call.1} parent=5 // pred_check_branch
        %296 = sbr.rel (%p293) target = $region44
      $region43: #{tpu_custom_call.1} parent=5 // pred_region
        %s297 = ssub.s32 %s20, 1
        %s298 = sand.u32 %s47, 1
        %s299 = scalar_lea.sflag [#allocation4], %s298
        %s300 = sand.u32 %s47, 1
        %s301 = smul.addr %s300, 512
        %s302 = scalar_lea.vmem [#allocation3], %s301
        // Predicated region
        $region45: #{tpu_custom_call.1} parent=43 // pred_check
          %p303 = pneg %p60
        $region46: #{tpu_custom_call.1} parent=43 // pred_check_branch
          %305 = sbr.rel (%p303) target = $region48
        $region47: #{tpu_custom_call.1} parent=43 // pred_region
          %307 = dma.done %s299, 8192
        $region48: #{tpu_custom_call.1} parent=43 // pred_fallthru
          _
        // Predicated region
        $region49: #{tpu_custom_call.1} parent=43 // pred_check
          %p308 = pneg %p86
        $region50: #{tpu_custom_call.1} parent=43 // pred_check_branch
          %310 = sbr.rel (%p308) target = $region52
        $region51: #{tpu_custom_call.1} parent=43 // pred_region
          %312 = dma.done [#allocation7], 8192
        $region52: #{tpu_custom_call.1} parent=43 // pred_fallthru
          _
        // Predicated region
        $region53: #{tpu_custom_call.1} parent=43 // pred_check
          %p313 = pneg %p107
        $region54: #{tpu_custom_call.1} parent=43 // pred_check_branch
          %315 = sbr.rel (%p313) target = $region56
        $region55: #{tpu_custom_call.1} parent=43 // pred_region
          %317 = dma.done [#allocation7], 2048
        $region56: #{tpu_custom_call.1} parent=43 // pred_fallthru
          _
        // Predicated region
        $region57: #{tpu_custom_call.1} parent=43 // pred_check
          %p318 = pneg %p149
        $region58: #{tpu_custom_call.1} parent=43 // pred_check_branch
          %320 = sbr.rel (%p318) target = $region60
        $region59: #{tpu_custom_call.1} parent=43 // pred_region
          %322 = dma.done [#allocation10], 2048
        $region60: #{tpu_custom_call.1} parent=43 // pred_fallthru
          _
        %s323 = sand.u32 %s47, 1
        %s324 = scalar_lea.sflag [#allocation4], %s323
        %s325 = sand.u32 %s47, 1
        %s326 = smul.addr %s325, 512
        %s327 = scalar_lea.vmem [#allocation3], %s326
        %p328 = pneg %p60
        %p329 = pneg %p57
        %p330 = pneg %p86
        %p331 = pneg %p83
        %p332 = pneg %p107
        %p333 = pneg %p104
        %p334 = pneg %p128
        %p335 = pneg %p125
        %p336 = pneg %p149
        %p337 = pneg %p146
        %p338 = pneg %p170
        %p339 = pneg %p167
        %p340 = pneg %p196
        %p341 = pneg %p193
        %s342 = sand.u32 %s183, 1
        %s343 = scalar_lea.sflag [#allocation5], %s342
        %s344 = sand.u32 %s183, 1
        %s345 = smul.addr %s344, 256
        %s346 = scalar_lea.vmem [#allocation11], %s345
        %s347 = smul.u32 32, %s29
        %s348 = smul.u32 4, %s30
        %s349 = smul.u32 64, %s30
        %s350 = smul.u32 32, %s29
        %p351 = scmp.eq.s32.totalorder %s30, 0
        // Predicated region
        $region61: #{tpu_custom_call.1} parent=43 // pred_check
          %p352 = pneg %p351
        $region62: #{tpu_custom_call.1} parent=43 // pred_check_branch
          %354 = sbr.rel (%p352) target = $region64
        $region63: #{tpu_custom_call.1} parent=43 // pred_region
          %355 = vst [vmem:[#allocation2] sm:$0xff] 0.0
          %356 = vst [vmem:[#allocation2 + $0x8] sm:$0xff] 0.0
          %357 = vst [vmem:[#allocation2 + $0x10] sm:$0xff] 0.0
          %358 = vst [vmem:[#allocation2 + $0x18] sm:$0xff] 0.0
          %359 = vst [vmem:[#allocation2 + $0x20] sm:$0xff] 0.0
          %360 = vst [vmem:[#allocation2 + $0x28] sm:$0xff] 0.0
          %361 = vst [vmem:[#allocation2 + $0x30] sm:$0xff] 0.0
          %362 = vst [vmem:[#allocation2 + $0x38] sm:$0xff] 0.0
          %363 = vst [vmem:[#allocation2 + $0x40] sm:$0xff] 0.0
          %364 = vst [vmem:[#allocation2 + $0x48] sm:$0xff] 0.0
          %365 = vst [vmem:[#allocation2 + $0x50] sm:$0xff] 0.0
          %366 = vst [vmem:[#allocation2 + $0x58] sm:$0xff] 0.0
          %367 = vst [vmem:[#allocation2 + $0x60] sm:$0xff] 0.0
          %368 = vst [vmem:[#allocation2 + $0x68] sm:$0xff] 0.0
          %369 = vst [vmem:[#allocation2 + $0x70] sm:$0xff] 0.0
          %370 = vst [vmem:[#allocation2 + $0x78] sm:$0xff] 0.0
          %371 = vst [vmem:[#allocation2 + $0x80] sm:$0xff] 0.0
          %372 = vst [vmem:[#allocation2 + $0x88] sm:$0xff] 0.0
          %373 = vst [vmem:[#allocation2 + $0x90] sm:$0xff] 0.0
          %374 = vst [vmem:[#allocation2 + $0x98] sm:$0xff] 0.0
          %375 = vst [vmem:[#allocation2 + $0xa0] sm:$0xff] 0.0
          %376 = vst [vmem:[#allocation2 + $0xa8] sm:$0xff] 0.0
          %377 = vst [vmem:[#allocation2 + $0xb0] sm:$0xff] 0.0
          %378 = vst [vmem:[#allocation2 + $0xb8] sm:$0xff] 0.0
          %379 = vst [vmem:[#allocation2 + $0xc0] sm:$0xff] 0.0
          %380 = vst [vmem:[#allocation2 + $0xc8] sm:$0xff] 0.0
          %381 = vst [vmem:[#allocation2 + $0xd0] sm:$0xff] 0.0
          %382 = vst [vmem:[#allocation2 + $0xd8] sm:$0xff] 0.0
          %383 = vst [vmem:[#allocation2 + $0xe0] sm:$0xff] 0.0
          %384 = vst [vmem:[#allocation2 + $0xe8] sm:$0xff] 0.0
          %385 = vst [vmem:[#allocation2 + $0xf0] sm:$0xff] 0.0
          %386 = vst [vmem:[#allocation2 + $0xf8] sm:$0xff] 0.0
        $region64: #{tpu_custom_call.1} parent=43 // pred_fallthru
          _
        %v387 = vld [vmem:[#allocation2] sm:$0xff]
        %v388 = vld [vmem:[#allocation2 + $0x8] sm:$0xff]
        %v389 = vld [vmem:[#allocation2 + $0x10] sm:$0xff]
        %v390 = vld [vmem:[#allocation2 + $0x18] sm:$0xff]
        %v391 = vld [vmem:[#allocation2 + $0x20] sm:$0xff]
        %v392 = vld [vmem:[#allocation2 + $0x28] sm:$0xff]
        %v393 = vld [vmem:[#allocation2 + $0x30] sm:$0xff]
        %v394 = vld [vmem:[#allocation2 + $0x38] sm:$0xff]
        %v395 = vld [vmem:[#allocation2 + $0x40] sm:$0xff]
        %v396 = vld [vmem:[#allocation2 + $0x48] sm:$0xff]
        %v397 = vld [vmem:[#allocation2 + $0x50] sm:$0xff]
        %v398 = vld [vmem:[#allocation2 + $0x58] sm:$0xff]
        %v399 = vld [vmem:[#allocation2 + $0x60] sm:$0xff]
        %v400 = vld [vmem:[#allocation2 + $0x68] sm:$0xff]
        %v401 = vld [vmem:[#allocation2 + $0x70] sm:$0xff]
        %v402 = vld [vmem:[#allocation2 + $0x78] sm:$0xff]
        %v403 = vld [vmem:[#allocation2 + $0x80] sm:$0xff]
        %v404 = vld [vmem:[#allocation2 + $0x88] sm:$0xff]
        %v405 = vld [vmem:[#allocation2 + $0x90] sm:$0xff]
        %v406 = vld [vmem:[#allocation2 + $0x98] sm:$0xff]
        %v407 = vld [vmem:[#allocation2 + $0xa0] sm:$0xff]
        %v408 = vld [vmem:[#allocation2 + $0xa8] sm:$0xff]
        %v409 = vld [vmem:[#allocation2 + $0xb0] sm:$0xff]
        %v410 = vld [vmem:[#allocation2 + $0xb8] sm:$0xff]
        %v411 = vld [vmem:[#allocation2 + $0xc0] sm:$0xff]
        %v412 = vld [vmem:[#allocation2 + $0xc8] sm:$0xff]
        %v413 = vld [vmem:[#allocation2 + $0xd0] sm:$0xff]
        %v414 = vld [vmem:[#allocation2 + $0xd8] sm:$0xff]
        %v415 = vld [vmem:[#allocation2 + $0xe0] sm:$0xff]
        %v416 = vld [vmem:[#allocation2 + $0xe8] sm:$0xff]
        %v417 = vld [vmem:[#allocation2 + $0xf0] sm:$0xff]
        %v418 = vld [vmem:[#allocation2 + $0xf8] sm:$0xff]
        %v419 = vld [vmem:[%s302] sm:$0xff]
        %v420 = vld [vmem:[%s302 + $0x8] sm:$0xff]
        %v421 = vld [vmem:[%s302 + $0x10] sm:$0xff]
        %v422 = vld [vmem:[%s302 + $0x18] sm:$0xff]
        %v423 = vld [vmem:[%s302 + $0x20] sm:$0xff]
        %v424 = vld [vmem:[%s302 + $0x28] sm:$0xff]
        %v425 = vld [vmem:[%s302 + $0x30] sm:$0xff]
        %v426 = vld [vmem:[%s302 + $0x38] sm:$0xff]
        %v427 = vld [vmem:[%s302 + $0x40] sm:$0xff]
        %v428 = vld [vmem:[%s302 + $0x48] sm:$0xff]
        %v429 = vld [vmem:[%s302 + $0x50] sm:$0xff]
        %v430 = vld [vmem:[%s302 + $0x58] sm:$0xff]
        %v431 = vld [vmem:[%s302 + $0x60] sm:$0xff]
        %v432 = vld [vmem:[%s302 + $0x68] sm:$0xff]
        %v433 = vld [vmem:[%s302 + $0x70] sm:$0xff]
        %v434 = vld [vmem:[%s302 + $0x78] sm:$0xff]
        %v435 = vld [vmem:[%s302 + $0x80] sm:$0xff]
        %v436 = vld [vmem:[%s302 + $0x88] sm:$0xff]
        %v437 = vld [vmem:[%s302 + $0x90] sm:$0xff]
        %v438 = vld [vmem:[%s302 + $0x98] sm:$0xff]
        %v439 = vld [vmem:[%s302 + $0xa0] sm:$0xff]
        %v440 = vld [vmem:[%s302 + $0xa8] sm:$0xff]
        %v441 = vld [vmem:[%s302 + $0xb0] sm:$0xff]
        %v442 = vld [vmem:[%s302 + $0xb8] sm:$0xff]
        %v443 = vld [vmem:[%s302 + $0xc0] sm:$0xff]
        %v444 = vld [vmem:[%s302 + $0xc8] sm:$0xff]
        %v445 = vld [vmem:[%s302 + $0xd0] sm:$0xff]
        %v446 = vld [vmem:[%s302 + $0xd8] sm:$0xff]
        %v447 = vld [vmem:[%s302 + $0xe0] sm:$0xff]
        %v448 = vld [vmem:[%s302 + $0xe8] sm:$0xff]
        %v449 = vld [vmem:[%s302 + $0xf0] sm:$0xff]
        %v450 = vld [vmem:[%s302 + $0xf8] sm:$0xff]
        %v451 = vld [vmem:[%s302 + $0x100] sm:$0xff]
        %v452 = vld [vmem:[%s302 + $0x108] sm:$0xff]
        %v453 = vld [vmem:[%s302 + $0x110] sm:$0xff]
        %v454 = vld [vmem:[%s302 + $0x118] sm:$0xff]
        %v455 = vld [vmem:[%s302 + $0x120] sm:$0xff]
        %v456 = vld [vmem:[%s302 + $0x128] sm:$0xff]
        %v457 = vld [vmem:[%s302 + $0x130] sm:$0xff]
        %v458 = vld [vmem:[%s302 + $0x138] sm:$0xff]
        %v459 = vld [vmem:[%s302 + $0x140] sm:$0xff]
        %v460 = vld [vmem:[%s302 + $0x148] sm:$0xff]
        %v461 = vld [vmem:[%s302 + $0x150] sm:$0xff]
        %v462 = vld [vmem:[%s302 + $0x158] sm:$0xff]
        %v463 = vld [vmem:[%s302 + $0x160] sm:$0xff]
        %v464 = vld [vmem:[%s302 + $0x168] sm:$0xff]
        %v465 = vld [vmem:[%s302 + $0x170] sm:$0xff]
        %v466 = vld [vmem:[%s302 + $0x178] sm:$0xff]
        %v467 = vld [vmem:[%s302 + $0x180] sm:$0xff]
        %v468 = vld [vmem:[%s302 + $0x188] sm:$0xff]
        %v469 = vld [vmem:[%s302 + $0x190] sm:$0xff]
        %v470 = vld [vmem:[%s302 + $0x198] sm:$0xff]
        %v471 = vld [vmem:[%s302 + $0x1a0] sm:$0xff]
        %v472 = vld [vmem:[%s302 + $0x1a8] sm:$0xff]
        %v473 = vld [vmem:[%s302 + $0x1b0] sm:$0xff]
        %v474 = vld [vmem:[%s302 + $0x1b8] sm:$0xff]
        %v475 = vld [vmem:[%s302 + $0x1c0] sm:$0xff]
        %v476 = vld [vmem:[%s302 + $0x1c8] sm:$0xff]
        %v477 = vld [vmem:[%s302 + $0x1d0] sm:$0xff]
        %v478 = vld [vmem:[%s302 + $0x1d8] sm:$0xff]
        %v479 = vld [vmem:[%s302 + $0x1e0] sm:$0xff]
        %v480 = vld [vmem:[%s302 + $0x1e8] sm:$0xff]
        %v481 = vld [vmem:[%s302 + $0x1f0] sm:$0xff]
        %v482 = vld [vmem:[%s302 + $0x1f8] sm:$0xff]
        %v483 = vunpack.c.l.bf16 %v419
        %v484 = vunpack.c.h.bf16 %v419
        %v485 = vunpack.c.l.bf16 %v420
        %v486 = vunpack.c.h.bf16 %v420
        %v487 = vunpack.c.l.bf16 %v421
        %v488 = vunpack.c.h.bf16 %v421
        %v489 = vunpack.c.l.bf16 %v422
        %v490 = vunpack.c.h.bf16 %v422
        %v491 = vunpack.c.l.bf16 %v423
        %v492 = vunpack.c.h.bf16 %v423
        %v493 = vunpack.c.l.bf16 %v424
        %v494 = vunpack.c.h.bf16 %v424
        %v495 = vunpack.c.l.bf16 %v425
        %v496 = vunpack.c.h.bf16 %v425
        %v497 = vunpack.c.l.bf16 %v426
        %v498 = vunpack.c.h.bf16 %v426
        %v499 = vunpack.c.l.bf16 %v427
        %v500 = vunpack.c.h.bf16 %v427
        %v501 = vunpack.c.l.bf16 %v428
        %v502 = vunpack.c.h.bf16 %v428
        %v503 = vunpack.c.l.bf16 %v429
        %v504 = vunpack.c.h.bf16 %v429
        %v505 = vunpack.c.l.bf16 %v430
        %v506 = vunpack.c.h.bf16 %v430
        %v507 = vunpack.c.l.bf16 %v431
        %v508 = vunpack.c.h.bf16 %v431
        %v509 = vunpack.c.l.bf16 %v432
        %v510 = vunpack.c.h.bf16 %v432
        %v511 = vunpack.c.l.bf16 %v433
        %v512 = vunpack.c.h.bf16 %v433
        %v513 = vunpack.c.l.bf16 %v434
        %v514 = vunpack.c.h.bf16 %v434
        %v515 = vunpack.c.l.bf16 %v435
        %v516 = vunpack.c.h.bf16 %v435
        %v517 = vunpack.c.l.bf16 %v436
        %v518 = vunpack.c.h.bf16 %v436
        %v519 = vunpack.c.l.bf16 %v437
        %v520 = vunpack.c.h.bf16 %v437
        %v521 = vunpack.c.l.bf16 %v438
        %v522 = vunpack.c.h.bf16 %v438
        %v523 = vunpack.c.l.bf16 %v439
        %v524 = vunpack.c.h.bf16 %v439
        %v525 = vunpack.c.l.bf16 %v440
        %v526 = vunpack.c.h.bf16 %v440
        %v527 = vunpack.c.l.bf16 %v441
        %v528 = vunpack.c.h.bf16 %v441
        %v529 = vunpack.c.l.bf16 %v442
        %v530 = vunpack.c.h.bf16 %v442
        %v531 = vunpack.c.l.bf16 %v443
        %v532 = vunpack.c.h.bf16 %v443
        %v533 = vunpack.c.l.bf16 %v444
        %v534 = vunpack.c.h.bf16 %v444
        %v535 = vunpack.c.l.bf16 %v445
        %v536 = vunpack.c.h.bf16 %v445
        %v537 = vunpack.c.l.bf16 %v446
        %v538 = vunpack.c.h.bf16 %v446
        %v539 = vunpack.c.l.bf16 %v447
        %v540 = vunpack.c.h.bf16 %v447
        %v541 = vunpack.c.l.bf16 %v448
        %v542 = vunpack.c.h.bf16 %v448
        %v543 = vunpack.c.l.bf16 %v449
        %v544 = vunpack.c.h.bf16 %v449
        %v545 = vunpack.c.l.bf16 %v450
        %v546 = vunpack.c.h.bf16 %v450
        %v547 = vunpack.c.l.bf16 %v451
        %v548 = vunpack.c.h.bf16 %v451
        %v549 = vunpack.c.l.bf16 %v452
        %v550 = vunpack.c.h.bf16 %v452
        %v551 = vunpack.c.l.bf16 %v453
        %v552 = vunpack.c.h.bf16 %v453
        %v553 = vunpack.c.l.bf16 %v454
        %v554 = vunpack.c.h.bf16 %v454
        %v555 = vunpack.c.l.bf16 %v455
        %v556 = vunpack.c.h.bf16 %v455
        %v557 = vunpack.c.l.bf16 %v456
        %v558 = vunpack.c.h.bf16 %v456
        %v559 = vunpack.c.l.bf16 %v457
        %v560 = vunpack.c.h.bf16 %v457
        %v561 = vunpack.c.l.bf16 %v458
        %v562 = vunpack.c.h.bf16 %v458
        %v563 = vunpack.c.l.bf16 %v459
        %v564 = vunpack.c.h.bf16 %v459
        %v565 = vunpack.c.l.bf16 %v460
        %v566 = vunpack.c.h.bf16 %v460
        %v567 = vunpack.c.l.bf16 %v461
        %v568 = vunpack.c.h.bf16 %v461
        %v569 = vunpack.c.l.bf16 %v462
        %v570 = vunpack.c.h.bf16 %v462
        %v571 = vunpack.c.l.bf16 %v463
        %v572 = vunpack.c.h.bf16 %v463
        %v573 = vunpack.c.l.bf16 %v464
        %v574 = vunpack.c.h.bf16 %v464
        %v575 = vunpack.c.l.bf16 %v465
        %v576 = vunpack.c.h.bf16 %v465
        %v577 = vunpack.c.l.bf16 %v466
        %v578 = vunpack.c.h.bf16 %v466
        %v579 = vunpack.c.l.bf16 %v467
        %v580 = vunpack.c.h.bf16 %v467
        %v581 = vunpack.c.l.bf16 %v468
        %v582 = vunpack.c.h.bf16 %v468
        %v583 = vunpack.c.l.bf16 %v469
        %v584 = vunpack.c.h.bf16 %v469
        %v585 = vunpack.c.l.bf16 %v470
        %v586 = vunpack.c.h.bf16 %v470
        %v587 = vunpack.c.l.bf16 %v471
        %v588 = vunpack.c.h.bf16 %v471
        %v589 = vunpack.c.l.bf16 %v472
        %v590 = vunpack.c.h.bf16 %v472
        %v591 = vunpack.c.l.bf16 %v473
        %v592 = vunpack.c.h.bf16 %v473
        %v593 = vunpack.c.l.bf16 %v474
        %v594 = vunpack.c.h.bf16 %v474
        %v595 = vunpack.c.l.bf16 %v475
        %v596 = vunpack.c.h.bf16 %v475
        %v597 = vunpack.c.l.bf16 %v476
        %v598 = vunpack.c.h.bf16 %v476
        %v599 = vunpack.c.l.bf16 %v477
        %v600 = vunpack.c.h.bf16 %v477
        %v601 = vunpack.c.l.bf16 %v478
        %v602 = vunpack.c.h.bf16 %v478
        %v603 = vunpack.c.l.bf16 %v479
        %v604 = vunpack.c.h.bf16 %v479
        %v605 = vunpack.c.l.bf16 %v480
        %v606 = vunpack.c.h.bf16 %v480
        %v607 = vunpack.c.l.bf16 %v481
        %v608 = vunpack.c.h.bf16 %v481
        %v609 = vunpack.c.l.bf16 %v482
        %v610 = vunpack.c.h.bf16 %v482
        %v611 = vld [vmem:[#allocation6] sm:$0xff]
        %v612 = vld [vmem:[#allocation6 + $0x8] sm:$0xff]
        %v613 = vld [vmem:[#allocation6 + $0x10] sm:$0xff]
        %v614 = vld [vmem:[#allocation6 + $0x18] sm:$0xff]
        %v615 = vld [vmem:[#allocation6 + $0x20] sm:$0xff]
        %v616 = vld [vmem:[#allocation6 + $0x28] sm:$0xff]
        %v617 = vld [vmem:[#allocation6 + $0x30] sm:$0xff]
        %v618 = vld [vmem:[#allocation6 + $0x38] sm:$0xff]
        %v619 = vld [vmem:[#allocation6 + $0x40] sm:$0xff]
        %v620 = vld [vmem:[#allocation6 + $0x48] sm:$0xff]
        %v621 = vld [vmem:[#allocation6 + $0x50] sm:$0xff]
        %v622 = vld [vmem:[#allocation6 + $0x58] sm:$0xff]
        %v623 = vld [vmem:[#allocation6 + $0x60] sm:$0xff]
        %v624 = vld [vmem:[#allocation6 + $0x68] sm:$0xff]
        %v625 = vld [vmem:[#allocation6 + $0x70] sm:$0xff]
        %v626 = vld [vmem:[#allocation6 + $0x78] sm:$0xff]
        %v627 = vld [vmem:[#allocation6 + $0x80] sm:$0xff]
        %v628 = vld [vmem:[#allocation6 + $0x88] sm:$0xff]
        %v629 = vld [vmem:[#allocation6 + $0x90] sm:$0xff]
        %v630 = vld [vmem:[#allocation6 + $0x98] sm:$0xff]
        %v631 = vld [vmem:[#allocation6 + $0xa0] sm:$0xff]
        %v632 = vld [vmem:[#allocation6 + $0xa8] sm:$0xff]
        %v633 = vld [vmem:[#allocation6 + $0xb0] sm:$0xff]
        %v634 = vld [vmem:[#allocation6 + $0xb8] sm:$0xff]
        %v635 = vld [vmem:[#allocation6 + $0xc0] sm:$0xff]
        %v636 = vld [vmem:[#allocation6 + $0xc8] sm:$0xff]
        %v637 = vld [vmem:[#allocation6 + $0xd0] sm:$0xff]
        %v638 = vld [vmem:[#allocation6 + $0xd8] sm:$0xff]
        %v639 = vld [vmem:[#allocation6 + $0xe0] sm:$0xff]
        %v640 = vld [vmem:[#allocation6 + $0xe8] sm:$0xff]
        %v641 = vld [vmem:[#allocation6 + $0xf0] sm:$0xff]
        %v642 = vld [vmem:[#allocation6 + $0xf8] sm:$0xff]
        %v643 = vld [vmem:[#allocation6 + $0x100] sm:$0xff]
        %v644 = vld [vmem:[#allocation6 + $0x108] sm:$0xff]
        %v645 = vld [vmem:[#allocation6 + $0x110] sm:$0xff]
        %v646 = vld [vmem:[#allocation6 + $0x118] sm:$0xff]
        %v647 = vld [vmem:[#allocation6 + $0x120] sm:$0xff]
        %v648 = vld [vmem:[#allocation6 + $0x128] sm:$0xff]
        %v649 = vld [vmem:[#allocation6 + $0x130] sm:$0xff]
        %v650 = vld [vmem:[#allocation6 + $0x138] sm:$0xff]
        %v651 = vld [vmem:[#allocation6 + $0x140] sm:$0xff]
        %v652 = vld [vmem:[#allocation6 + $0x148] sm:$0xff]
        %v653 = vld [vmem:[#allocation6 + $0x150] sm:$0xff]
        %v654 = vld [vmem:[#allocation6 + $0x158] sm:$0xff]
        %v655 = vld [vmem:[#allocation6 + $0x160] sm:$0xff]
        %v656 = vld [vmem:[#allocation6 + $0x168] sm:$0xff]
        %v657 = vld [vmem:[#allocation6 + $0x170] sm:$0xff]
        %v658 = vld [vmem:[#allocation6 + $0x178] sm:$0xff]
        %v659 = vld [vmem:[#allocation6 + $0x180] sm:$0xff]
        %v660 = vld [vmem:[#allocation6 + $0x188] sm:$0xff]
        %v661 = vld [vmem:[#allocation6 + $0x190] sm:$0xff]
        %v662 = vld [vmem:[#allocation6 + $0x198] sm:$0xff]
        %v663 = vld [vmem:[#allocation6 + $0x1a0] sm:$0xff]
        %v664 = vld [vmem:[#allocation6 + $0x1a8] sm:$0xff]
        %v665 = vld [vmem:[#allocation6 + $0x1b0] sm:$0xff]
        %v666 = vld [vmem:[#allocation6 + $0x1b8] sm:$0xff]
        %v667 = vld [vmem:[#allocation6 + $0x1c0] sm:$0xff]
        %v668 = vld [vmem:[#allocation6 + $0x1c8] sm:$0xff]
        %v669 = vld [vmem:[#allocation6 + $0x1d0] sm:$0xff]
        %v670 = vld [vmem:[#allocation6 + $0x1d8] sm:$0xff]
        %v671 = vld [vmem:[#allocation6 + $0x1e0] sm:$0xff]
        %v672 = vld [vmem:[#allocation6 + $0x1e8] sm:$0xff]
        %v673 = vld [vmem:[#allocation6 + $0x1f0] sm:$0xff]
        %v674 = vld [vmem:[#allocation6 + $0x1f8] sm:$0xff]
        %675 = vmatpush.msra.mxu0 %v626
        %676 = vmatpush.msra.mxu0 %v625
        %677 = vmatpush.msra.mxu0 %v624
        %678 = vmatpush.msra.mxu0 %v623
        %679 = vmatpush.msra.mxu0 %v622
        %680 = vmatpush.msra.mxu0 %v621
        %681 = vmatpush.msra.mxu0 %v620
        %682 = vmatpush.msra.mxu0 %v619
        %683 = vmatpush.msra.mxu0 %v618
        %684 = vmatpush.msra.mxu0 %v617
        %685 = vmatpush.msra.mxu0 %v616
        %686 = vmatpush.msra.mxu0 %v615
        %687 = vmatpush.msra.mxu0 %v614
        %688 = vmatpush.msra.mxu0 %v613
        %689 = vmatpush.msra.mxu0 %v612
        %690 = vmatpush.msra.mxu0 %v611
        %691 = vmatmul.f32.gmra.mxu0 %v483
        %v692 = vpop.f32.mrf.mxu0
        %v693 = vadd.f32 0.0, %v692
        %694 = vmatmul.f32.gmra.mxu0 %v487
        %v695 = vpop.f32.mrf.mxu0
        %v696 = vadd.f32 0.0, %v695
        %697 = vmatmul.f32.gmra.mxu0 %v491
        %v698 = vpop.f32.mrf.mxu0
        %v699 = vadd.f32 0.0, %v698
        %700 = vmatmul.f32.gmra.mxu0 %v495
        %v701 = vpop.f32.mrf.mxu0
        %v702 = vadd.f32 0.0, %v701
        %703 = vmatmul.f32.gmra.mxu0 %v499
        %v704 = vpop.f32.mrf.mxu0
        %v705 = vadd.f32 0.0, %v704
        %706 = vmatmul.f32.gmra.mxu0 %v503
        %v707 = vpop.f32.mrf.mxu0
        %v708 = vadd.f32 0.0, %v707
        %709 = vmatmul.f32.gmra.mxu0 %v507
        %v710 = vpop.f32.mrf.mxu0
        %v711 = vadd.f32 0.0, %v710
        %712 = vmatmul.f32.gmra.mxu0 %v511
        %v713 = vpop.f32.mrf.mxu0
        %v714 = vadd.f32 0.0, %v713
        %715 = vmatmul.f32.gmra.mxu0 %v515
        %v716 = vpop.f32.mrf.mxu0
        %v717 = vadd.f32 0.0, %v716
        %718 = vmatmul.f32.gmra.mxu0 %v519
        %v719 = vpop.f32.mrf.mxu0
        %v720 = vadd.f32 0.0, %v719
        %721 = vmatmul.f32.gmra.mxu0 %v523
        %v722 = vpop.f32.mrf.mxu0
        %v723 = vadd.f32 0.0, %v722
        %724 = vmatmul.f32.gmra.mxu0 %v527
        %v725 = vpop.f32.mrf.mxu0
        %v726 = vadd.f32 0.0, %v725
        %727 = vmatmul.f32.gmra.mxu0 %v531
        %v728 = vpop.f32.mrf.mxu0
        %v729 = vadd.f32 0.0, %v728
        %730 = vmatmul.f32.gmra.mxu0 %v535
        %v731 = vpop.f32.mrf.mxu0
        %v732 = vadd.f32 0.0, %v731
        %733 = vmatmul.f32.gmra.mxu0 %v539
        %v734 = vpop.f32.mrf.mxu0
        %v735 = vadd.f32 0.0, %v734
        %736 = vmatmul.f32.gmra.mxu0 %v543
        %v737 = vpop.f32.mrf.mxu0
        %v738 = vadd.f32 0.0, %v737
        %739 = vmatmul.f32.gmra.mxu0 %v547
        %v740 = vpop.f32.mrf.mxu0
        %v741 = vadd.f32 0.0, %v740
        %742 = vmatmul.f32.gmra.mxu0 %v551
        %v743 = vpop.f32.mrf.mxu0
        %v744 = vadd.f32 0.0, %v743
        %745 = vmatmul.f32.gmra.mxu0 %v555
        %v746 = vpop.f32.mrf.mxu0
        %v747 = vadd.f32 0.0, %v746
        %748 = vmatmul.f32.gmra.mxu0 %v559
        %v749 = vpop.f32.mrf.mxu0
        %v750 = vadd.f32 0.0, %v749
        %751 = vmatmul.f32.gmra.mxu0 %v563
        %v752 = vpop.f32.mrf.mxu0
        %v753 = vadd.f32 0.0, %v752
        %754 = vmatmul.f32.gmra.mxu0 %v567
        %v755 = vpop.f32.mrf.mxu0
        %v756 = vadd.f32 0.0, %v755
        %757 = vmatmul.f32.gmra.mxu0 %v571
        %v758 = vpop.f32.mrf.mxu0
        %v759 = vadd.f32 0.0, %v758
        %760 = vmatmul.f32.gmra.mxu0 %v575
        %v761 = vpop.f32.mrf.mxu0
        %v762 = vadd.f32 0.0, %v761
        %763 = vmatmul.f32.gmra.mxu0 %v579
        %v764 = vpop.f32.mrf.mxu0
        %v765 = vadd.f32 0.0, %v764
        %766 = vmatmul.f32.gmra.mxu0 %v583
        %v767 = vpop.f32.mrf.mxu0
        %v768 = vadd.f32 0.0, %v767
        %769 = vmatmul.f32.gmra.mxu0 %v587
        %v770 = vpop.f32.mrf.mxu0
        %v771 = vadd.f32 0.0, %v770
        %772 = vmatmul.f32.gmra.mxu0 %v591
        %v773 = vpop.f32.mrf.mxu0
        %v774 = vadd.f32 0.0, %v773
        %775 = vmatmul.f32.gmra.mxu0 %v595
        %v776 = vpop.f32.mrf.mxu0
        %v777 = vadd.f32 0.0, %v776
        %778 = vmatmul.f32.gmra.mxu0 %v599
        %v779 = vpop.f32.mrf.mxu0
        %v780 = vadd.f32 0.0, %v779
        %781 = vmatmul.f32.gmra.mxu0 %v603
        %v782 = vpop.f32.mrf.mxu0
        %v783 = vadd.f32 0.0, %v782
        %784 = vmatmul.f32.gmra.mxu0 %v607
        %v785 = vpop.f32.mrf.mxu0
        %v786 = vadd.f32 0.0, %v785
        %787 = vdwg.mxu0
        %788 = vmatpush.msra.mxu0 %v642
        %789 = vmatpush.msra.mxu0 %v641
        %790 = vmatpush.msra.mxu0 %v640
        %791 = vmatpush.msra.mxu0 %v639
        %792 = vmatpush.msra.mxu0 %v638
        %793 = vmatpush.msra.mxu0 %v637
        %794 = vmatpush.msra.mxu0 %v636
        %795 = vmatpush.msra.mxu0 %v635
        %796 = vmatpush.msra.mxu0 %v634
        %797 = vmatpush.msra.mxu0 %v633
        %798 = vmatpush.msra.mxu0 %v632
        %799 = vmatpush.msra.mxu0 %v631
        %800 = vmatpush.msra.mxu0 %v630
        %801 = vmatpush.msra.mxu0 %v629
        %802 = vmatpush.msra.mxu0 %v628
        %803 = vmatpush.msra.mxu0 %v627
        %804 = vmatmul.f32.gmra.mxu0 %v484
        %v805 = vpop.f32.mrf.mxu0
        %v806 = vadd.f32 %v693, %v805
        %807 = vmatmul.f32.gmra.mxu0 %v488
        %v808 = vpop.f32.mrf.mxu0
        %v809 = vadd.f32 %v696, %v808
        %810 = vmatmul.f32.gmra.mxu0 %v492
        %v811 = vpop.f32.mrf.mxu0
        %v812 = vadd.f32 %v699, %v811
        %813 = vmatmul.f32.gmra.mxu0 %v496
        %v814 = vpop.f32.mrf.mxu0
        %v815 = vadd.f32 %v702, %v814
        %816 = vmatmul.f32.gmra.mxu0 %v500
        %v817 = vpop.f32.mrf.mxu0
        %v818 = vadd.f32 %v705, %v817
        %819 = vmatmul.f32.gmra.mxu0 %v504
        %v820 = vpop.f32.mrf.mxu0
        %v821 = vadd.f32 %v708, %v820
        %822 = vmatmul.f32.gmra.mxu0 %v508
        %v823 = vpop.f32.mrf.mxu0
        %v824 = vadd.f32 %v711, %v823
        %825 = vmatmul.f32.gmra.mxu0 %v512
        %v826 = vpop.f32.mrf.mxu0
        %v827 = vadd.f32 %v714, %v826
        %828 = vmatmul.f32.gmra.mxu0 %v516
        %v829 = vpop.f32.mrf.mxu0
        %v830 = vadd.f32 %v717, %v829
        %831 = vmatmul.f32.gmra.mxu0 %v520
        %v832 = vpop.f32.mrf.mxu0
        %v833 = vadd.f32 %v720, %v832
        %834 = vmatmul.f32.gmra.mxu0 %v524
        %v835 = vpop.f32.mrf.mxu0
        %v836 = vadd.f32 %v723, %v835
        %837 = vmatmul.f32.gmra.mxu0 %v528
        %v838 = vpop.f32.mrf.mxu0
        %v839 = vadd.f32 %v726, %v838
        %840 = vmatmul.f32.gmra.mxu0 %v532
        %v841 = vpop.f32.mrf.mxu0
        %v842 = vadd.f32 %v729, %v841
        %843 = vmatmul.f32.gmra.mxu0 %v536
        %v844 = vpop.f32.mrf.mxu0
        %v845 = vadd.f32 %v732, %v844
        %846 = vmatmul.f32.gmra.mxu0 %v540
        %v847 = vpop.f32.mrf.mxu0
        %v848 = vadd.f32 %v735, %v847
        %849 = vmatmul.f32.gmra.mxu0 %v544
        %v850 = vpop.f32.mrf.mxu0
        %v851 = vadd.f32 %v738, %v850
        %852 = vmatmul.f32.gmra.mxu0 %v548
        %v853 = vpop.f32.mrf.mxu0
        %v854 = vadd.f32 %v741, %v853
        %855 = vmatmul.f32.gmra.mxu0 %v552
        %v856 = vpop.f32.mrf.mxu0
        %v857 = vadd.f32 %v744, %v856
        %858 = vmatmul.f32.gmra.mxu0 %v556
        %v859 = vpop.f32.mrf.mxu0
        %v860 = vadd.f32 %v747, %v859
        %861 = vmatmul.f32.gmra.mxu0 %v560
        %v862 = vpop.f32.mrf.mxu0
        %v863 = vadd.f32 %v750, %v862
        %864 = vmatmul.f32.gmra.mxu0 %v564
        %v865 = vpop.f32.mrf.mxu0
        %v866 = vadd.f32 %v753, %v865
        %867 = vmatmul.f32.gmra.mxu0 %v568
        %v868 = vpop.f32.mrf.mxu0
        %v869 = vadd.f32 %v756, %v868
        %870 = vmatmul.f32.gmra.mxu0 %v572
        %v871 = vpop.f32.mrf.mxu0
        %v872 = vadd.f32 %v759, %v871
        %873 = vmatmul.f32.gmra.mxu0 %v576
        %v874 = vpop.f32.mrf.mxu0
        %v875 = vadd.f32 %v762, %v874
        %876 = vmatmul.f32.gmra.mxu0 %v580
        %v877 = vpop.f32.mrf.mxu0
        %v878 = vadd.f32 %v765, %v877
        %879 = vmatmul.f32.gmra.mxu0 %v584
        %v880 = vpop.f32.mrf.mxu0
        %v881 = vadd.f32 %v768, %v880
        %882 = vmatmul.f32.gmra.mxu0 %v588
        %v883 = vpop.f32.mrf.mxu0
        %v884 = vadd.f32 %v771, %v883
        %885 = vmatmul.f32.gmra.mxu0 %v592
        %v886 = vpop.f32.mrf.mxu0
        %v887 = vadd.f32 %v774, %v886
        %888 = vmatmul.f32.gmra.mxu0 %v596
        %v889 = vpop.f32.mrf.mxu0
        %v890 = vadd.f32 %v777, %v889
        %891 = vmatmul.f32.gmra.mxu0 %v600
        %v892 = vpop.f32.mrf.mxu0
        %v893 = vadd.f32 %v780, %v892
        %894 = vmatmul.f32.gmra.mxu0 %v604
        %v895 = vpop.f32.mrf.mxu0
        %v896 = vadd.f32 %v783, %v895
        %897 = vmatmul.f32.gmra.mxu0 %v608
        %v898 = vpop.f32.mrf.mxu0
        %v899 = vadd.f32 %v786, %v898
        %900 = vdwg.mxu0
        %901 = vmatpush.msra.mxu0 %v658
        %902 = vmatpush.msra.mxu0 %v657
        %903 = vmatpush.msra.mxu0 %v656
        %904 = vmatpush.msra.mxu0 %v655
        %905 = vmatpush.msra.mxu0 %v654
        %906 = vmatpush.msra.mxu0 %v653
        %907 = vmatpush.msra.mxu0 %v652
        %908 = vmatpush.msra.mxu0 %v651
        %909 = vmatpush.msra.mxu0 %v650
        %910 = vmatpush.msra.mxu0 %v649
        %911 = vmatpush.msra.mxu0 %v648
        %912 = vmatpush.msra.mxu0 %v647
        %913 = vmatpush.msra.mxu0 %v646
        %914 = vmatpush.msra.mxu0 %v645
        %915 = vmatpush.msra.mxu0 %v644
        %916 = vmatpush.msra.mxu0 %v643
        %917 = vmatmul.f32.gmra.mxu0 %v485
        %v918 = vpop.f32.mrf.mxu0
        %v919 = vadd.f32 %v806, %v918
        %920 = vmatmul.f32.gmra.mxu0 %v489
        %v921 = vpop.f32.mrf.mxu0
        %v922 = vadd.f32 %v809, %v921
        %923 = vmatmul.f32.gmra.mxu0 %v493
        %v924 = vpop.f32.mrf.mxu0
        %v925 = vadd.f32 %v812, %v924
        %926 = vmatmul.f32.gmra.mxu0 %v497
        %v927 = vpop.f32.mrf.mxu0
        %v928 = vadd.f32 %v815, %v927
        %929 = vmatmul.f32.gmra.mxu0 %v501
        %v930 = vpop.f32.mrf.mxu0
        %v931 = vadd.f32 %v818, %v930
        %932 = vmatmul.f32.gmra.mxu0 %v505
        %v933 = vpop.f32.mrf.mxu0
        %v934 = vadd.f32 %v821, %v933
        %935 = vmatmul.f32.gmra.mxu0 %v509
        %v936 = vpop.f32.mrf.mxu0
        %v937 = vadd.f32 %v824, %v936
        %938 = vmatmul.f32.gmra.mxu0 %v513
        %v939 = vpop.f32.mrf.mxu0
        %v940 = vadd.f32 %v827, %v939
        %941 = vmatmul.f32.gmra.mxu0 %v517
        %v942 = vpop.f32.mrf.mxu0
        %v943 = vadd.f32 %v830, %v942
        %944 = vmatmul.f32.gmra.mxu0 %v521
        %v945 = vpop.f32.mrf.mxu0
        %v946 = vadd.f32 %v833, %v945
        %947 = vmatmul.f32.gmra.mxu0 %v525
        %v948 = vpop.f32.mrf.mxu0
        %v949 = vadd.f32 %v836, %v948
        %950 = vmatmul.f32.gmra.mxu0 %v529
        %v951 = vpop.f32.mrf.mxu0
        %v952 = vadd.f32 %v839, %v951
        %953 = vmatmul.f32.gmra.mxu0 %v533
        %v954 = vpop.f32.mrf.mxu0
        %v955 = vadd.f32 %v842, %v954
        %956 = vmatmul.f32.gmra.mxu0 %v537
        %v957 = vpop.f32.mrf.mxu0
        %v958 = vadd.f32 %v845, %v957
        %959 = vmatmul.f32.gmra.mxu0 %v541
        %v960 = vpop.f32.mrf.mxu0
        %v961 = vadd.f32 %v848, %v960
        %962 = vmatmul.f32.gmra.mxu0 %v545
        %v963 = vpop.f32.mrf.mxu0
        %v964 = vadd.f32 %v851, %v963
        %965 = vmatmul.f32.gmra.mxu0 %v549
        %v966 = vpop.f32.mrf.mxu0
        %v967 = vadd.f32 %v854, %v966
        %968 = vmatmul.f32.gmra.mxu0 %v553
        %v969 = vpop.f32.mrf.mxu0
        %v970 = vadd.f32 %v857, %v969
        %971 = vmatmul.f32.gmra.mxu0 %v557
        %v972 = vpop.f32.mrf.mxu0
        %v973 = vadd.f32 %v860, %v972
        %974 = vmatmul.f32.gmra.mxu0 %v561
        %v975 = vpop.f32.mrf.mxu0
        %v976 = vadd.f32 %v863, %v975
        %977 = vmatmul.f32.gmra.mxu0 %v565
        %v978 = vpop.f32.mrf.mxu0
        %v979 = vadd.f32 %v866, %v978
        %980 = vmatmul.f32.gmra.mxu0 %v569
        %v981 = vpop.f32.mrf.mxu0
        %v982 = vadd.f32 %v869, %v981
        %983 = vmatmul.f32.gmra.mxu0 %v573
        %v984 = vpop.f32.mrf.mxu0
        %v985 = vadd.f32 %v872, %v984
        %986 = vmatmul.f32.gmra.mxu0 %v577
        %v987 = vpop.f32.mrf.mxu0
        %v988 = vadd.f32 %v875, %v987
        %989 = vmatmul.f32.gmra.mxu0 %v581
        %v990 = vpop.f32.mrf.mxu0
        %v991 = vadd.f32 %v878, %v990
        %992 = vmatmul.f32.gmra.mxu0 %v585
        %v993 = vpop.f32.mrf.mxu0
        %v994 = vadd.f32 %v881, %v993
        %995 = vmatmul.f32.gmra.mxu0 %v589
        %v996 = vpop.f32.mrf.mxu0
        %v997 = vadd.f32 %v884, %v996
        %998 = vmatmul.f32.gmra.mxu0 %v593
        %v999 = vpop.f32.mrf.mxu0
        %v1000 = vadd.f32 %v887, %v999
        %1001 = vmatmul.f32.gmra.mxu0 %v597
        %v1002 = vpop.f32.mrf.mxu0
        %v1003 = vadd.f32 %v890, %v1002
        %1004 = vmatmul.f32.gmra.mxu0 %v601
        %v1005 = vpop.f32.mrf.mxu0
        %v1006 = vadd.f32 %v893, %v1005
        %1007 = vmatmul.f32.gmra.mxu0 %v605
        %v1008 = vpop.f32.mrf.mxu0
        %v1009 = vadd.f32 %v896, %v1008
        %1010 = vmatmul.f32.gmra.mxu0 %v609
        %v1011 = vpop.f32.mrf.mxu0
        %v1012 = vadd.f32 %v899, %v1011
        %1013 = vdwg.mxu0
        %1014 = vmatpush.msra.mxu0 %v674
        %1015 = vmatpush.msra.mxu0 %v673
        %1016 = vmatpush.msra.mxu0 %v672
        %1017 = vmatpush.msra.mxu0 %v671
        %1018 = vmatpush.msra.mxu0 %v670
        %1019 = vmatpush.msra.mxu0 %v669
        %1020 = vmatpush.msra.mxu0 %v668
        %1021 = vmatpush.msra.mxu0 %v667
        %1022 = vmatpush.msra.mxu0 %v666
        %1023 = vmatpush.msra.mxu0 %v665
        %1024 = vmatpush.msra.mxu0 %v664
        %1025 = vmatpush.msra.mxu0 %v663
        %1026 = vmatpush.msra.mxu0 %v662
        %1027 = vmatpush.msra.mxu0 %v661
        %1028 = vmatpush.msra.mxu0 %v660
        %1029 = vmatpush.msra.mxu0 %v659
        %1030 = vmatmul.f32.gmra.mxu0 %v486
        %v1031 = vpop.f32.mrf.mxu0
        %v1032 = vadd.f32 %v919, %v1031
        %1033 = vmatmul.f32.gmra.mxu0 %v490
        %v1034 = vpop.f32.mrf.mxu0
        %v1035 = vadd.f32 %v922, %v1034
        %1036 = vmatmul.f32.gmra.mxu0 %v494
        %v1037 = vpop.f32.mrf.mxu0
        %v1038 = vadd.f32 %v925, %v1037
        %1039 = vmatmul.f32.gmra.mxu0 %v498
        %v1040 = vpop.f32.mrf.mxu0
        %v1041 = vadd.f32 %v928, %v1040
        %1042 = vmatmul.f32.gmra.mxu0 %v502
        %v1043 = vpop.f32.mrf.mxu0
        %v1044 = vadd.f32 %v931, %v1043
        %1045 = vmatmul.f32.gmra.mxu0 %v506
        %v1046 = vpop.f32.mrf.mxu0
        %v1047 = vadd.f32 %v934, %v1046
        %1048 = vmatmul.f32.gmra.mxu0 %v510
        %v1049 = vpop.f32.mrf.mxu0
        %v1050 = vadd.f32 %v937, %v1049
        %1051 = vmatmul.f32.gmra.mxu0 %v514
        %v1052 = vpop.f32.mrf.mxu0
        %v1053 = vadd.f32 %v940, %v1052
        %1054 = vmatmul.f32.gmra.mxu0 %v518
        %v1055 = vpop.f32.mrf.mxu0
        %v1056 = vadd.f32 %v943, %v1055
        %1057 = vmatmul.f32.gmra.mxu0 %v522
        %v1058 = vpop.f32.mrf.mxu0
        %v1059 = vadd.f32 %v946, %v1058
        %1060 = vmatmul.f32.gmra.mxu0 %v526
        %v1061 = vpop.f32.mrf.mxu0
        %v1062 = vadd.f32 %v949, %v1061
        %1063 = vmatmul.f32.gmra.mxu0 %v530
        %v1064 = vpop.f32.mrf.mxu0
        %v1065 = vadd.f32 %v952, %v1064
        %1066 = vmatmul.f32.gmra.mxu0 %v534
        %v1067 = vpop.f32.mrf.mxu0
        %v1068 = vadd.f32 %v955, %v1067
        %1069 = vmatmul.f32.gmra.mxu0 %v538
        %v1070 = vpop.f32.mrf.mxu0
        %v1071 = vadd.f32 %v958, %v1070
        %1072 = vmatmul.f32.gmra.mxu0 %v542
        %v1073 = vpop.f32.mrf.mxu0
        %v1074 = vadd.f32 %v961, %v1073
        %1075 = vmatmul.f32.gmra.mxu0 %v546
        %v1076 = vpop.f32.mrf.mxu0
        %v1077 = vadd.f32 %v964, %v1076
        %1078 = vmatmul.f32.gmra.mxu0 %v550
        %v1079 = vpop.f32.mrf.mxu0
        %v1080 = vadd.f32 %v967, %v1079
        %1081 = vmatmul.f32.gmra.mxu0 %v554
        %v1082 = vpop.f32.mrf.mxu0
        %v1083 = vadd.f32 %v970, %v1082
        %1084 = vmatmul.f32.gmra.mxu0 %v558
        %v1085 = vpop.f32.mrf.mxu0
        %v1086 = vadd.f32 %v973, %v1085
        %1087 = vmatmul.f32.gmra.mxu0 %v562
        %v1088 = vpop.f32.mrf.mxu0
        %v1089 = vadd.f32 %v976, %v1088
        %1090 = vmatmul.f32.gmra.mxu0 %v566
        %v1091 = vpop.f32.mrf.mxu0
        %v1092 = vadd.f32 %v979, %v1091
        %1093 = vmatmul.f32.gmra.mxu0 %v570
        %v1094 = vpop.f32.mrf.mxu0
        %v1095 = vadd.f32 %v982, %v1094
        %1096 = vmatmul.f32.gmra.mxu0 %v574
        %v1097 = vpop.f32.mrf.mxu0
        %v1098 = vadd.f32 %v985, %v1097
        %1099 = vmatmul.f32.gmra.mxu0 %v578
        %v1100 = vpop.f32.mrf.mxu0
        %v1101 = vadd.f32 %v988, %v1100
        %1102 = vmatmul.f32.gmra.mxu0 %v582
        %v1103 = vpop.f32.mrf.mxu0
        %v1104 = vadd.f32 %v991, %v1103
        %1105 = vmatmul.f32.gmra.mxu0 %v586
        %v1106 = vpop.f32.mrf.mxu0
        %v1107 = vadd.f32 %v994, %v1106
        %1108 = vmatmul.f32.gmra.mxu0 %v590
        %v1109 = vpop.f32.mrf.mxu0
        %v1110 = vadd.f32 %v997, %v1109
        %1111 = vmatmul.f32.gmra.mxu0 %v594
        %v1112 = vpop.f32.mrf.mxu0
        %v1113 = vadd.f32 %v1000, %v1112
        %1114 = vmatmul.f32.gmra.mxu0 %v598
        %v1115 = vpop.f32.mrf.mxu0
        %v1116 = vadd.f32 %v1003, %v1115
        %1117 = vmatmul.f32.gmra.mxu0 %v602
        %v1118 = vpop.f32.mrf.mxu0
        %v1119 = vadd.f32 %v1006, %v1118
        %1120 = vmatmul.f32.gmra.mxu0 %v606
        %v1121 = vpop.f32.mrf.mxu0
        %v1122 = vadd.f32 %v1009, %v1121
        %1123 = vmatmul.f32.gmra.mxu0 %v610
        %v1124 = vpop.f32.mrf.mxu0
        %v1125 = vadd.f32 %v1012, %v1124
        %1126 = vdwg.mxu0
        %v1127 = vadd.f32 %v387, %v1032
        %v1128 = vadd.f32 %v388, %v1035
        %v1129 = vadd.f32 %v389, %v1038
        %v1130 = vadd.f32 %v390, %v1041
        %v1131 = vadd.f32 %v391, %v1044
        %v1132 = vadd.f32 %v392, %v1047
        %v1133 = vadd.f32 %v393, %v1050
        %v1134 = vadd.f32 %v394, %v1053
        %v1135 = vadd.f32 %v395, %v1056
        %v1136 = vadd.f32 %v396, %v1059
        %v1137 = vadd.f32 %v397, %v1062
        %v1138 = vadd.f32 %v398, %v1065
        %v1139 = vadd.f32 %v399, %v1068
        %v1140 = vadd.f32 %v400, %v1071
        %v1141 = vadd.f32 %v401, %v1074
        %v1142 = vadd.f32 %v402, %v1077
        %v1143 = vadd.f32 %v403, %v1080
        %v1144 = vadd.f32 %v404, %v1083
        %v1145 = vadd.f32 %v405, %v1086
        %v1146 = vadd.f32 %v406, %v1089
        %v1147 = vadd.f32 %v407, %v1092
        %v1148 = vadd.f32 %v408, %v1095
        %v1149 = vadd.f32 %v409, %v1098
        %v1150 = vadd.f32 %v410, %v1101
        %v1151 = vadd.f32 %v411, %v1104
        %v1152 = vadd.f32 %v412, %v1107
        %v1153 = vadd.f32 %v413, %v1110
        %v1154 = vadd.f32 %v414, %v1113
        %v1155 = vadd.f32 %v415, %v1116
        %v1156 = vadd.f32 %v416, %v1119
        %v1157 = vadd.f32 %v417, %v1122
        %v1158 = vadd.f32 %v418, %v1125
        %1159 = vst [vmem:[#allocation2] sm:$0xff] %v1127
        %1160 = vst [vmem:[#allocation2 + $0x8] sm:$0xff] %v1128
        %1161 = vst [vmem:[#allocation2 + $0x10] sm:$0xff] %v1129
        %1162 = vst [vmem:[#allocation2 + $0x18] sm:$0xff] %v1130
        %1163 = vst [vmem:[#allocation2 + $0x20] sm:$0xff] %v1131
        %1164 = vst [vmem:[#allocation2 + $0x28] sm:$0xff] %v1132
        %1165 = vst [vmem:[#allocation2 + $0x30] sm:$0xff] %v1133
        %1166 = vst [vmem:[#allocation2 + $0x38] sm:$0xff] %v1134
        %1167 = vst [vmem:[#allocation2 + $0x40] sm:$0xff] %v1135
        %1168 = vst [vmem:[#allocation2 + $0x48] sm:$0xff] %v1136
        %1169 = vst [vmem:[#allocation2 + $0x50] sm:$0xff] %v1137
        %1170 = vst [vmem:[#allocation2 + $0x58] sm:$0xff] %v1138
        %1171 = vst [vmem:[#allocation2 + $0x60] sm:$0xff] %v1139
        %1172 = vst [vmem:[#allocation2 + $0x68] sm:$0xff] %v1140
        %1173 = vst [vmem:[#allocation2 + $0x70] sm:$0xff] %v1141
        %1174 = vst [vmem:[#allocation2 + $0x78] sm:$0xff] %v1142
        %1175 = vst [vmem:[#allocation2 + $0x80] sm:$0xff] %v1143
        %1176 = vst [vmem:[#allocation2 + $0x88] sm:$0xff] %v1144
        %1177 = vst [vmem:[#allocation2 + $0x90] sm:$0xff] %v1145
        %1178 = vst [vmem:[#allocation2 + $0x98] sm:$0xff] %v1146
        %1179 = vst [vmem:[#allocation2 + $0xa0] sm:$0xff] %v1147
        %1180 = vst [vmem:[#allocation2 + $0xa8] sm:$0xff] %v1148
        %1181 = vst [vmem:[#allocation2 + $0xb0] sm:$0xff] %v1149
        %1182 = vst [vmem:[#allocation2 + $0xb8] sm:$0xff] %v1150
        %1183 = vst [vmem:[#allocation2 + $0xc0] sm:$0xff] %v1151
        %1184 = vst [vmem:[#allocation2 + $0xc8] sm:$0xff] %v1152
        %1185 = vst [vmem:[#allocation2 + $0xd0] sm:$0xff] %v1153
        %1186 = vst [vmem:[#allocation2 + $0xd8] sm:$0xff] %v1154
        %1187 = vst [vmem:[#allocation2 + $0xe0] sm:$0xff] %v1155
        %1188 = vst [vmem:[#allocation2 + $0xe8] sm:$0xff] %v1156
        %1189 = vst [vmem:[#allocation2 + $0xf0] sm:$0xff] %v1157
        %1190 = vst [vmem:[#allocation2 + $0xf8] sm:$0xff] %v1158
        // Predicated region
        $region65: #{tpu_custom_call.1} parent=43 // pred_check
          %p1191 = pneg %p351
        $region66: #{tpu_custom_call.1} parent=43 // pred_check_branch
          %1193 = sbr.rel (%p1191) target = $region68
        $region67: #{tpu_custom_call.1} parent=43 // pred_region
          %v1194 = vld [vmem:[#allocation2] sm:$0xff]
          %v1195 = vld [vmem:[#allocation2 + $0x8] sm:$0xff]
          %v1196 = vld [vmem:[#allocation2 + $0x10] sm:$0xff]
          %v1197 = vld [vmem:[#allocation2 + $0x18] sm:$0xff]
          %v1198 = vld [vmem:[#allocation2 + $0x20] sm:$0xff]
          %v1199 = vld [vmem:[#allocation2 + $0x28] sm:$0xff]
          %v1200 = vld [vmem:[#allocation2 + $0x30] sm:$0xff]
          %v1201 = vld [vmem:[#allocation2 + $0x38] sm:$0xff]
          %v1202 = vld [vmem:[#allocation2 + $0x40] sm:$0xff]
          %v1203 = vld [vmem:[#allocation2 + $0x48] sm:$0xff]
          %v1204 = vld [vmem:[#allocation2 + $0x50] sm:$0xff]
          %v1205 = vld [vmem:[#allocation2 + $0x58] sm:$0xff]
          %v1206 = vld [vmem:[#allocation2 + $0x60] sm:$0xff]
          %v1207 = vld [vmem:[#allocation2 + $0x68] sm:$0xff]
          %v1208 = vld [vmem:[#allocation2 + $0x70] sm:$0xff]
          %v1209 = vld [vmem:[#allocation2 + $0x78] sm:$0xff]
          %v1210 = vld [vmem:[#allocation2 + $0x80] sm:$0xff]
          %v1211 = vld [vmem:[#allocation2 + $0x88] sm:$0xff]
          %v1212 = vld [vmem:[#allocation2 + $0x90] sm:$0xff]
          %v1213 = vld [vmem:[#allocation2 + $0x98] sm:$0xff]
          %v1214 = vld [vmem:[#allocation2 + $0xa0] sm:$0xff]
          %v1215 = vld [vmem:[#allocation2 + $0xa8] sm:$0xff]
          %v1216 = vld [vmem:[#allocation2 + $0xb0] sm:$0xff]
          %v1217 = vld [vmem:[#allocation2 + $0xb8] sm:$0xff]
          %v1218 = vld [vmem:[#allocation2 + $0xc0] sm:$0xff]
          %v1219 = vld [vmem:[#allocation2 + $0xc8] sm:$0xff]
          %v1220 = vld [vmem:[#allocation2 + $0xd0] sm:$0xff]
          %v1221 = vld [vmem:[#allocation2 + $0xd8] sm:$0xff]
          %v1222 = vld [vmem:[#allocation2 + $0xe0] sm:$0xff]
          %v1223 = vld [vmem:[#allocation2 + $0xe8] sm:$0xff]
          %v1224 = vld [vmem:[#allocation2 + $0xf0] sm:$0xff]
          %v1225 = vld [vmem:[#allocation2 + $0xf8] sm:$0xff]
          %v1226 = vld [vmem:[#allocation8] sm:$0xff]
          %v1227 = vld [vmem:[#allocation8 + $0x8] sm:$0xff]
          %v1228 = vld [vmem:[#allocation8 + $0x10] sm:$0xff]
          %v1229 = vld [vmem:[#allocation8 + $0x18] sm:$0xff]
          %v1230 = vld [vmem:[#allocation8 + $0x20] sm:$0xff]
          %v1231 = vld [vmem:[#allocation8 + $0x28] sm:$0xff]
          %v1232 = vld [vmem:[#allocation8 + $0x30] sm:$0xff]
          %v1233 = vld [vmem:[#allocation8 + $0x38] sm:$0xff]
          %v1234 = vld [vmem:[#allocation8 + $0x40] sm:$0xff]
          %v1235 = vld [vmem:[#allocation8 + $0x48] sm:$0xff]
          %v1236 = vld [vmem:[#allocation8 + $0x50] sm:$0xff]
          %v1237 = vld [vmem:[#allocation8 + $0x58] sm:$0xff]
          %v1238 = vld [vmem:[#allocation8 + $0x60] sm:$0xff]
          %v1239 = vld [vmem:[#allocation8 + $0x68] sm:$0xff]
          %v1240 = vld [vmem:[#allocation8 + $0x70] sm:$0xff]
          %v1241 = vld [vmem:[#allocation8 + $0x78] sm:$0xff]
          %v1242 = vld [vmem:[%s3] sm:$0x1]
          %v1244 = vperm.slane %v1242, 0
          %1246 = vmatpush.msra.mxu0 %v1241
          %1247 = vmatpush.msra.mxu0 %v1240
          %1248 = vmatpush.msra.mxu0 %v1239
          %1249 = vmatpush.msra.mxu0 %v1238
          %1250 = vmatpush.msra.mxu0 %v1237
          %1251 = vmatpush.msra.mxu0 %v1236
          %1252 = vmatpush.msra.mxu0 %v1235
          %1253 = vmatpush.msra.mxu0 %v1234
          %1254 = vmatpush.msra.mxu0 %v1233
          %1255 = vmatpush.msra.mxu0 %v1232
          %1256 = vmatpush.msra.mxu0 %v1231
          %1257 = vmatpush.msra.mxu0 %v1230
          %1258 = vmatpush.msra.mxu0 %v1229
          %1259 = vmatpush.msra.mxu0 %v1228
          %1260 = vmatpush.msra.mxu0 %v1227
          %1261 = vmatpush.msra.mxu0 %v1226
          %1262 = vmatmul.f32.gmra.mxu0 %v1194
          %v1263 = vpop.f32.mrf.mxu0
          %v1264 = vadd.f32 %v1244, %v1263
          %1265 = vmatmul.f32.gmra.mxu0 %v1195
          %v1266 = vpop.f32.mrf.mxu0
          %v1267 = vadd.f32 %v1244, %v1266
          %1268 = vmatmul.f32.gmra.mxu0 %v1196
          %v1269 = vpop.f32.mrf.mxu0
          %v1270 = vadd.f32 %v1244, %v1269
          %1271 = vmatmul.f32.gmra.mxu0 %v1197
          %v1272 = vpop.f32.mrf.mxu0
          %v1273 = vadd.f32 %v1244, %v1272
          %1274 = vmatmul.f32.gmra.mxu0 %v1198
          %v1275 = vpop.f32.mrf.mxu0
          %v1276 = vadd.f32 %v1244, %v1275
          %1277 = vmatmul.f32.gmra.mxu0 %v1199
          %v1278 = vpop.f32.mrf.mxu0
          %v1279 = vadd.f32 %v1244, %v1278
          %1280 = vmatmul.f32.gmra.mxu0 %v1200
          %v1281 = vpop.f32.mrf.mxu0
          %v1282 = vadd.f32 %v1244, %v1281
          %1283 = vmatmul.f32.gmra.mxu0 %v1201
          %v1284 = vpop.f32.mrf.mxu0
          %v1285 = vadd.f32 %v1244, %v1284
          %1286 = vmatmul.f32.gmra.mxu0 %v1202
          %v1287 = vpop.f32.mrf.mxu0
          %v1288 = vadd.f32 %v1244, %v1287
          %1289 = vmatmul.f32.gmra.mxu0 %v1203
          %v1290 = vpop.f32.mrf.mxu0
          %v1291 = vadd.f32 %v1244, %v1290
          %1292 = vmatmul.f32.gmra.mxu0 %v1204
          %v1293 = vpop.f32.mrf.mxu0
          %v1294 = vadd.f32 %v1244, %v1293
          %1295 = vmatmul.f32.gmra.mxu0 %v1205
          %v1296 = vpop.f32.mrf.mxu0
          %v1297 = vadd.f32 %v1244, %v1296
          %1298 = vmatmul.f32.gmra.mxu0 %v1206
          %v1299 = vpop.f32.mrf.mxu0
          %v1300 = vadd.f32 %v1244, %v1299
          %1301 = vmatmul.f32.gmra.mxu0 %v1207
          %v1302 = vpop.f32.mrf.mxu0
          %v1303 = vadd.f32 %v1244, %v1302
          %1304 = vmatmul.f32.gmra.mxu0 %v1208
          %v1305 = vpop.f32.mrf.mxu0
          %v1306 = vadd.f32 %v1244, %v1305
          %1307 = vmatmul.f32.gmra.mxu0 %v1209
          %v1308 = vpop.f32.mrf.mxu0
          %v1309 = vadd.f32 %v1244, %v1308
          %1310 = vmatmul.f32.gmra.mxu0 %v1210
          %v1311 = vpop.f32.mrf.mxu0
          %v1312 = vadd.f32 %v1244, %v1311
          %1313 = vmatmul.f32.gmra.mxu0 %v1211
          %v1314 = vpop.f32.mrf.mxu0
          %v1315 = vadd.f32 %v1244, %v1314
          %1316 = vmatmul.f32.gmra.mxu0 %v1212
          %v1317 = vpop.f32.mrf.mxu0
          %v1318 = vadd.f32 %v1244, %v1317
          %1319 = vmatmul.f32.gmra.mxu0 %v1213
          %v1320 = vpop.f32.mrf.mxu0
          %v1321 = vadd.f32 %v1244, %v1320
          %1322 = vmatmul.f32.gmra.mxu0 %v1214
          %v1323 = vpop.f32.mrf.mxu0
          %v1324 = vadd.f32 %v1244, %v1323
          %1325 = vmatmul.f32.gmra.mxu0 %v1215
          %v1326 = vpop.f32.mrf.mxu0
          %v1327 = vadd.f32 %v1244, %v1326
          %1328 = vmatmul.f32.gmra.mxu0 %v1216
          %v1329 = vpop.f32.mrf.mxu0
          %v1330 = vadd.f32 %v1244, %v1329
          %1331 = vmatmul.f32.gmra.mxu0 %v1217
          %v1332 = vpop.f32.mrf.mxu0
          %v1333 = vadd.f32 %v1244, %v1332
          %1334 = vmatmul.f32.gmra.mxu0 %v1218
          %v1335 = vpop.f32.mrf.mxu0
          %v1336 = vadd.f32 %v1244, %v1335
          %1337 = vmatmul.f32.gmra.mxu0 %v1219
          %v1338 = vpop.f32.mrf.mxu0
          %v1339 = vadd.f32 %v1244, %v1338
          %1340 = vmatmul.f32.gmra.mxu0 %v1220
          %v1341 = vpop.f32.mrf.mxu0
          %v1342 = vadd.f32 %v1244, %v1341
          %1343 = vmatmul.f32.gmra.mxu0 %v1221
          %v1344 = vpop.f32.mrf.mxu0
          %v1345 = vadd.f32 %v1244, %v1344
          %1346 = vmatmul.f32.gmra.mxu0 %v1222
          %v1347 = vpop.f32.mrf.mxu0
          %v1348 = vadd.f32 %v1244, %v1347
          %1349 = vmatmul.f32.gmra.mxu0 %v1223
          %v1350 = vpop.f32.mrf.mxu0
          %v1351 = vadd.f32 %v1244, %v1350
          %1352 = vmatmul.f32.gmra.mxu0 %v1224
          %v1353 = vpop.f32.mrf.mxu0
          %v1354 = vadd.f32 %v1244, %v1353
          %1355 = vmatmul.f32.gmra.mxu0 %v1225
          %v1356 = vpop.f32.mrf.mxu0
          %v1357 = vadd.f32 %v1244, %v1356
          %1358 = vdwg.mxu0
          %vm1359 = vcmp.gt.f32.partialorder %v1264, 0.0
          %vm1360 = vcmp.gt.f32.partialorder %v1267, 0.0
          %vm1361 = vcmp.gt.f32.partialorder %v1270, 0.0
          %vm1362 = vcmp.gt.f32.partialorder %v1273, 0.0
          %vm1363 = vcmp.gt.f32.partialorder %v1276, 0.0
          %vm1364 = vcmp.gt.f32.partialorder %v1279, 0.0
          %vm1365 = vcmp.gt.f32.partialorder %v1282, 0.0
          %vm1366 = vcmp.gt.f32.partialorder %v1285, 0.0
          %vm1367 = vcmp.gt.f32.partialorder %v1288, 0.0
          %vm1368 = vcmp.gt.f32.partialorder %v1291, 0.0
          %vm1369 = vcmp.gt.f32.partialorder %v1294, 0.0
          %vm1370 = vcmp.gt.f32.partialorder %v1297, 0.0
          %vm1371 = vcmp.gt.f32.partialorder %v1300, 0.0
          %vm1372 = vcmp.gt.f32.partialorder %v1303, 0.0
          %vm1373 = vcmp.gt.f32.partialorder %v1306, 0.0
          %vm1374 = vcmp.gt.f32.partialorder %v1309, 0.0
          %vm1375 = vcmp.gt.f32.partialorder %v1312, 0.0
          %vm1376 = vcmp.gt.f32.partialorder %v1315, 0.0
          %vm1377 = vcmp.gt.f32.partialorder %v1318, 0.0
          %vm1378 = vcmp.gt.f32.partialorder %v1321, 0.0
          %vm1379 = vcmp.gt.f32.partialorder %v1324, 0.0
          %vm1380 = vcmp.gt.f32.partialorder %v1327, 0.0
          %vm1381 = vcmp.gt.f32.partialorder %v1330, 0.0
          %vm1382 = vcmp.gt.f32.partialorder %v1333, 0.0
          %vm1383 = vcmp.gt.f32.partialorder %v1336, 0.0
          %vm1384 = vcmp.gt.f32.partialorder %v1339, 0.0
          %vm1385 = vcmp.gt.f32.partialorder %v1342, 0.0
          %vm1386 = vcmp.gt.f32.partialorder %v1345, 0.0
          %vm1387 = vcmp.gt.f32.partialorder %v1348, 0.0
          %vm1388 = vcmp.gt.f32.partialorder %v1351, 0.0
          %vm1389 = vcmp.gt.f32.partialorder %v1354, 0.0
          %vm1390 = vcmp.gt.f32.partialorder %v1357, 0.0
          %v1391 = vmin.f32 %v1264, 0.0
          %v1392 = vmin.f32 %v1267, 0.0
          %v1393 = vmin.f32 %v1270, 0.0
          %v1394 = vmin.f32 %v1273, 0.0
          %v1395 = vmin.f32 %v1276, 0.0
          %v1396 = vmin.f32 %v1279, 0.0
          %v1397 = vmin.f32 %v1282, 0.0
          %v1398 = vmin.f32 %v1285, 0.0
          %v1399 = vmin.f32 %v1288, 0.0
          %v1400 = vmin.f32 %v1291, 0.0
          %v1401 = vmin.f32 %v1294, 0.0
          %v1402 = vmin.f32 %v1297, 0.0
          %v1403 = vmin.f32 %v1300, 0.0
          %v1404 = vmin.f32 %v1303, 0.0
          %v1405 = vmin.f32 %v1306, 0.0
          %v1406 = vmin.f32 %v1309, 0.0
          %v1407 = vmin.f32 %v1312, 0.0
          %v1408 = vmin.f32 %v1315, 0.0
          %v1409 = vmin.f32 %v1318, 0.0
          %v1410 = vmin.f32 %v1321, 0.0
          %v1411 = vmin.f32 %v1324, 0.0
          %v1412 = vmin.f32 %v1327, 0.0
          %v1413 = vmin.f32 %v1330, 0.0
          %v1414 = vmin.f32 %v1333, 0.0
          %v1415 = vmin.f32 %v1336, 0.0
          %v1416 = vmin.f32 %v1339, 0.0
          %v1417 = vmin.f32 %v1342, 0.0
          %v1418 = vmin.f32 %v1345, 0.0
          %v1419 = vmin.f32 %v1348, 0.0
          %v1420 = vmin.f32 %v1351, 0.0
          %v1421 = vmin.f32 %v1354, 0.0
          %v1422 = vmin.f32 %v1357, 0.0
          %v1423 = vmul.f32 %v1391, 1.442695
          %v1424 = vpow.pop %v1423
          %v1425 = vmul.f32 %v1392, 1.442695
          %v1426 = vpow.pop %v1425
          %v1427 = vmul.f32 %v1393, 1.442695
          %v1428 = vpow.pop %v1427
          %v1429 = vmul.f32 %v1394, 1.442695
          %v1430 = vpow.pop %v1429
          %v1431 = vmul.f32 %v1395, 1.442695
          %v1432 = vpow.pop %v1431
          %v1433 = vmul.f32 %v1396, 1.442695
          %v1434 = vpow.pop %v1433
          %v1435 = vmul.f32 %v1397, 1.442695
          %v1436 = vpow.pop %v1435
          %v1437 = vmul.f32 %v1398, 1.442695
          %v1438 = vpow.pop %v1437
          %v1439 = vmul.f32 %v1399, 1.442695
          %v1440 = vpow.pop %v1439
          %v1441 = vmul.f32 %v1400, 1.442695
          %v1442 = vpow.pop %v1441
          %v1443 = vmul.f32 %v1401, 1.442695
          %v1444 = vpow.pop %v1443
          %v1445 = vmul.f32 %v1402, 1.442695
          %v1446 = vpow.pop %v1445
          %v1447 = vmul.f32 %v1403, 1.442695
          %v1448 = vpow.pop %v1447
          %v1449 = vmul.f32 %v1404, 1.442695
          %v1450 = vpow.pop %v1449
          %v1451 = vmul.f32 %v1405, 1.442695
          %v1452 = vpow.pop %v1451
          %v1453 = vmul.f32 %v1406, 1.442695
          %v1454 = vpow.pop %v1453
          %v1455 = vmul.f32 %v1407, 1.442695
          %v1456 = vpow.pop %v1455
          %v1457 = vmul.f32 %v1408, 1.442695
          %v1458 = vpow.pop %v1457
          %v1459 = vmul.f32 %v1409, 1.442695
          %v1460 = vpow.pop %v1459
          %v1461 = vmul.f32 %v1410, 1.442695
          %v1462 = vpow.pop %v1461
          %v1463 = vmul.f32 %v1411, 1.442695
          %v1464 = vpow.pop %v1463
          %v1465 = vmul.f32 %v1412, 1.442695
          %v1466 = vpow.pop %v1465
          %v1467 = vmul.f32 %v1413, 1.442695
          %v1468 = vpow.pop %v1467
          %v1469 = vmul.f32 %v1414, 1.442695
          %v1470 = vpow.pop %v1469
          %v1471 = vmul.f32 %v1415, 1.442695
          %v1472 = vpow.pop %v1471
          %v1473 = vmul.f32 %v1416, 1.442695
          %v1474 = vpow.pop %v1473
          %v1475 = vmul.f32 %v1417, 1.442695
          %v1476 = vpow.pop %v1475
          %v1477 = vmul.f32 %v1418, 1.442695
          %v1478 = vpow.pop %v1477
          %v1479 = vmul.f32 %v1419, 1.442695
          %v1480 = vpow.pop %v1479
          %v1481 = vmul.f32 %v1420, 1.442695
          %v1482 = vpow.pop %v1481
          %v1483 = vmul.f32 %v1421, 1.442695
          %v1484 = vpow.pop %v1483
          %v1485 = vmul.f32 %v1422, 1.442695
          %v1486 = vpow.pop %v1485
          %v1487 = vsub.f32 %v1424, 1.0
          %v1488 = vsub.f32 %v1426, 1.0
          %v1489 = vsub.f32 %v1428, 1.0
          %v1490 = vsub.f32 %v1430, 1.0
          %v1491 = vsub.f32 %v1432, 1.0
          %v1492 = vsub.f32 %v1434, 1.0
          %v1493 = vsub.f32 %v1436, 1.0
          %v1494 = vsub.f32 %v1438, 1.0
          %v1495 = vsub.f32 %v1440, 1.0
          %v1496 = vsub.f32 %v1442, 1.0
          %v1497 = vsub.f32 %v1444, 1.0
          %v1498 = vsub.f32 %v1446, 1.0
          %v1499 = vsub.f32 %v1448, 1.0
          %v1500 = vsub.f32 %v1450, 1.0
          %v1501 = vsub.f32 %v1452, 1.0
          %v1502 = vsub.f32 %v1454, 1.0
          %v1503 = vsub.f32 %v1456, 1.0
          %v1504 = vsub.f32 %v1458, 1.0
          %v1505 = vsub.f32 %v1460, 1.0
          %v1506 = vsub.f32 %v1462, 1.0
          %v1507 = vsub.f32 %v1464, 1.0
          %v1508 = vsub.f32 %v1466, 1.0
          %v1509 = vsub.f32 %v1468, 1.0
          %v1510 = vsub.f32 %v1470, 1.0
          %v1511 = vsub.f32 %v1472, 1.0
          %v1512 = vsub.f32 %v1474, 1.0
          %v1513 = vsub.f32 %v1476, 1.0
          %v1514 = vsub.f32 %v1478, 1.0
          %v1515 = vsub.f32 %v1480, 1.0
          %v1516 = vsub.f32 %v1482, 1.0
          %v1517 = vsub.f32 %v1484, 1.0
          %v1518 = vsub.f32 %v1486, 1.0
          %v1519 = vsel %vm1359, %v1264, %v1487
          %v1520 = vsel %vm1360, %v1267, %v1488
          %v1521 = vsel %vm1361, %v1270, %v1489
          %v1522 = vsel %vm1362, %v1273, %v1490
          %v1523 = vsel %vm1363, %v1276, %v1491
          %v1524 = vsel %vm1364, %v1279, %v1492
          %v1525 = vsel %vm1365, %v1282, %v1493
          %v1526 = vsel %vm1366, %v1285, %v1494
          %v1527 = vsel %vm1367, %v1288, %v1495
          %v1528 = vsel %vm1368, %v1291, %v1496
          %v1529 = vsel %vm1369, %v1294, %v1497
          %v1530 = vsel %vm1370, %v1297, %v1498
          %v1531 = vsel %vm1371, %v1300, %v1499
          %v1532 = vsel %vm1372, %v1303, %v1500
          %v1533 = vsel %vm1373, %v1306, %v1501
          %v1534 = vsel %vm1374, %v1309, %v1502
          %v1535 = vsel %vm1375, %v1312, %v1503
          %v1536 = vsel %vm1376, %v1315, %v1504
          %v1537 = vsel %vm1377, %v1318, %v1505
          %v1538 = vsel %vm1378, %v1321, %v1506
          %v1539 = vsel %vm1379, %v1324, %v1507
          %v1540 = vsel %vm1380, %v1327, %v1508
          %v1541 = vsel %vm1381, %v1330, %v1509
          %v1542 = vsel %vm1382, %v1333, %v1510
          %v1543 = vsel %vm1383, %v1336, %v1511
          %v1544 = vsel %vm1384, %v1339, %v1512
          %v1545 = vsel %vm1385, %v1342, %v1513
          %v1546 = vsel %vm1386, %v1345, %v1514
          %v1547 = vsel %vm1387, %v1348, %v1515
          %v1548 = vsel %vm1388, %v1351, %v1516
          %v1549 = vsel %vm1389, %v1354, %v1517
          %v1550 = vsel %vm1390, %v1357, %v1518
          %v1551 = vld [vmem:[#allocation9] sm:$0xff]
          %v1552 = vld [vmem:[#allocation9 + $0x8] sm:$0xff]
          %v1553 = vld [vmem:[#allocation9 + $0x10] sm:$0xff]
          %v1554 = vld [vmem:[#allocation9 + $0x18] sm:$0xff]
          %v1555 = vld [vmem:[#allocation9 + $0x20] sm:$0xff]
          %v1556 = vld [vmem:[#allocation9 + $0x28] sm:$0xff]
          %v1557 = vld [vmem:[#allocation9 + $0x30] sm:$0xff]
          %v1558 = vld [vmem:[#allocation9 + $0x38] sm:$0xff]
          %v1559 = vld [vmem:[#allocation9 + $0x40] sm:$0xff]
          %v1560 = vld [vmem:[#allocation9 + $0x48] sm:$0xff]
          %v1561 = vld [vmem:[#allocation9 + $0x50] sm:$0xff]
          %v1562 = vld [vmem:[#allocation9 + $0x58] sm:$0xff]
          %v1563 = vld [vmem:[#allocation9 + $0x60] sm:$0xff]
          %v1564 = vld [vmem:[#allocation9 + $0x68] sm:$0xff]
          %v1565 = vld [vmem:[#allocation9 + $0x70] sm:$0xff]
          %v1566 = vld [vmem:[#allocation9 + $0x78] sm:$0xff]
          %v1567 = vld [vmem:[%s5] sm:$0x1]
          %v1569 = vperm.slane %v1567, 0
          %1571 = vmatpush.msra.mxu0 %v1566
          %1572 = vmatpush.msra.mxu0 %v1565
          %1573 = vmatpush.msra.mxu0 %v1564
          %1574 = vmatpush.msra.mxu0 %v1563
          %1575 = vmatpush.msra.mxu0 %v1562
          %1576 = vmatpush.msra.mxu0 %v1561
          %1577 = vmatpush.msra.mxu0 %v1560
          %1578 = vmatpush.msra.mxu0 %v1559
          %1579 = vmatpush.msra.mxu0 %v1558
          %1580 = vmatpush.msra.mxu0 %v1557
          %1581 = vmatpush.msra.mxu0 %v1556
          %1582 = vmatpush.msra.mxu0 %v1555
          %1583 = vmatpush.msra.mxu0 %v1554
          %1584 = vmatpush.msra.mxu0 %v1553
          %1585 = vmatpush.msra.mxu0 %v1552
          %1586 = vmatpush.msra.mxu0 %v1551
          %1587 = vmatmul.f32.gmra.mxu0 %v1519
          %v1588 = vpop.f32.mrf.mxu0
          %v1589 = vadd.f32 %v1569, %v1588
          %1590 = vmatmul.f32.gmra.mxu0 %v1520
          %v1591 = vpop.f32.mrf.mxu0
          %v1592 = vadd.f32 %v1569, %v1591
          %1593 = vmatmul.f32.gmra.mxu0 %v1521
          %v1594 = vpop.f32.mrf.mxu0
          %v1595 = vadd.f32 %v1569, %v1594
          %1596 = vmatmul.f32.gmra.mxu0 %v1522
          %v1597 = vpop.f32.mrf.mxu0
          %v1598 = vadd.f32 %v1569, %v1597
          %1599 = vmatmul.f32.gmra.mxu0 %v1523
          %v1600 = vpop.f32.mrf.mxu0
          %v1601 = vadd.f32 %v1569, %v1600
          %1602 = vmatmul.f32.gmra.mxu0 %v1524
          %v1603 = vpop.f32.mrf.mxu0
          %v1604 = vadd.f32 %v1569, %v1603
          %1605 = vmatmul.f32.gmra.mxu0 %v1525
          %v1606 = vpop.f32.mrf.mxu0
          %v1607 = vadd.f32 %v1569, %v1606
          %1608 = vmatmul.f32.gmra.mxu0 %v1526
          %v1609 = vpop.f32.mrf.mxu0
          %v1610 = vadd.f32 %v1569, %v1609
          %1611 = vmatmul.f32.gmra.mxu0 %v1527
          %v1612 = vpop.f32.mrf.mxu0
          %v1613 = vadd.f32 %v1569, %v1612
          %1614 = vmatmul.f32.gmra.mxu0 %v1528
          %v1615 = vpop.f32.mrf.mxu0
          %v1616 = vadd.f32 %v1569, %v1615
          %1617 = vmatmul.f32.gmra.mxu0 %v1529
          %v1618 = vpop.f32.mrf.mxu0
          %v1619 = vadd.f32 %v1569, %v1618
          %1620 = vmatmul.f32.gmra.mxu0 %v1530
          %v1621 = vpop.f32.mrf.mxu0
          %v1622 = vadd.f32 %v1569, %v1621
          %1623 = vmatmul.f32.gmra.mxu0 %v1531
          %v1624 = vpop.f32.mrf.mxu0
          %v1625 = vadd.f32 %v1569, %v1624
          %1626 = vmatmul.f32.gmra.mxu0 %v1532
          %v1627 = vpop.f32.mrf.mxu0
          %v1628 = vadd.f32 %v1569, %v1627
          %1629 = vmatmul.f32.gmra.mxu0 %v1533
          %v1630 = vpop.f32.mrf.mxu0
          %v1631 = vadd.f32 %v1569, %v1630
          %1632 = vmatmul.f32.gmra.mxu0 %v1534
          %v1633 = vpop.f32.mrf.mxu0
          %v1634 = vadd.f32 %v1569, %v1633
          %1635 = vmatmul.f32.gmra.mxu0 %v1535
          %v1636 = vpop.f32.mrf.mxu0
          %v1637 = vadd.f32 %v1569, %v1636
          %1638 = vmatmul.f32.gmra.mxu0 %v1536
          %v1639 = vpop.f32.mrf.mxu0
          %v1640 = vadd.f32 %v1569, %v1639
          %1641 = vmatmul.f32.gmra.mxu0 %v1537
          %v1642 = vpop.f32.mrf.mxu0
          %v1643 = vadd.f32 %v1569, %v1642
          %1644 = vmatmul.f32.gmra.mxu0 %v1538
          %v1645 = vpop.f32.mrf.mxu0
          %v1646 = vadd.f32 %v1569, %v1645
          %1647 = vmatmul.f32.gmra.mxu0 %v1539
          %v1648 = vpop.f32.mrf.mxu0
          %v1649 = vadd.f32 %v1569, %v1648
          %1650 = vmatmul.f32.gmra.mxu0 %v1540
          %v1651 = vpop.f32.mrf.mxu0
          %v1652 = vadd.f32 %v1569, %v1651
          %1653 = vmatmul.f32.gmra.mxu0 %v1541
          %v1654 = vpop.f32.mrf.mxu0
          %v1655 = vadd.f32 %v1569, %v1654
          %1656 = vmatmul.f32.gmra.mxu0 %v1542
          %v1657 = vpop.f32.mrf.mxu0
          %v1658 = vadd.f32 %v1569, %v1657
          %1659 = vmatmul.f32.gmra.mxu0 %v1543
          %v1660 = vpop.f32.mrf.mxu0
          %v1661 = vadd.f32 %v1569, %v1660
          %1662 = vmatmul.f32.gmra.mxu0 %v1544
          %v1663 = vpop.f32.mrf.mxu0
          %v1664 = vadd.f32 %v1569, %v1663
          %1665 = vmatmul.f32.gmra.mxu0 %v1545
          %v1666 = vpop.f32.mrf.mxu0
          %v1667 = vadd.f32 %v1569, %v1666
          %1668 = vmatmul.f32.gmra.mxu0 %v1546
          %v1669 = vpop.f32.mrf.mxu0
          %v1670 = vadd.f32 %v1569, %v1669
          %1671 = vmatmul.f32.gmra.mxu0 %v1547
          %v1672 = vpop.f32.mrf.mxu0
          %v1673 = vadd.f32 %v1569, %v1672
          %1674 = vmatmul.f32.gmra.mxu0 %v1548
          %v1675 = vpop.f32.mrf.mxu0
          %v1676 = vadd.f32 %v1569, %v1675
          %1677 = vmatmul.f32.gmra.mxu0 %v1549
          %v1678 = vpop.f32.mrf.mxu0
          %v1679 = vadd.f32 %v1569, %v1678
          %1680 = vmatmul.f32.gmra.mxu0 %v1550
          %v1681 = vpop.f32.mrf.mxu0
          %v1682 = vadd.f32 %v1569, %v1681
          %1683 = vdwg.mxu0
          %1684 = vst [vmem:[%s346] sm:$0xff] %v1589
          %1685 = vst [vmem:[%s346 + $0x8] sm:$0xff] %v1592
          %1686 = vst [vmem:[%s346 + $0x10] sm:$0xff] %v1595
          %1687 = vst [vmem:[%s346 + $0x18] sm:$0xff] %v1598
          %1688 = vst [vmem:[%s346 + $0x20] sm:$0xff] %v1601
          %1689 = vst [vmem:[%s346 + $0x28] sm:$0xff] %v1604
          %1690 = vst [vmem:[%s346 + $0x30] sm:$0xff] %v1607
          %1691 = vst [vmem:[%s346 + $0x38] sm:$0xff] %v1610
          %1692 = vst [vmem:[%s346 + $0x40] sm:$0xff] %v1613
          %1693 = vst [vmem:[%s346 + $0x48] sm:$0xff] %v1616
          %1694 = vst [vmem:[%s346 + $0x50] sm:$0xff] %v1619
          %1695 = vst [vmem:[%s346 + $0x58] sm:$0xff] %v1622
          %1696 = vst [vmem:[%s346 + $0x60] sm:$0xff] %v1625
          %1697 = vst [vmem:[%s346 + $0x68] sm:$0xff] %v1628
          %1698 = vst [vmem:[%s346 + $0x70] sm:$0xff] %v1631
          %1699 = vst [vmem:[%s346 + $0x78] sm:$0xff] %v1634
          %1700 = vst [vmem:[%s346 + $0x80] sm:$0xff] %v1637
          %1701 = vst [vmem:[%s346 + $0x88] sm:$0xff] %v1640
          %1702 = vst [vmem:[%s346 + $0x90] sm:$0xff] %v1643
          %1703 = vst [vmem:[%s346 + $0x98] sm:$0xff] %v1646
          %1704 = vst [vmem:[%s346 + $0xa0] sm:$0xff] %v1649
          %1705 = vst [vmem:[%s346 + $0xa8] sm:$0xff] %v1652
          %1706 = vst [vmem:[%s346 + $0xb0] sm:$0xff] %v1655
          %1707 = vst [vmem:[%s346 + $0xb8] sm:$0xff] %v1658
          %1708 = vst [vmem:[%s346 + $0xc0] sm:$0xff] %v1661
          %1709 = vst [vmem:[%s346 + $0xc8] sm:$0xff] %v1664
          %1710 = vst [vmem:[%s346 + $0xd0] sm:$0xff] %v1667
          %1711 = vst [vmem:[%s346 + $0xd8] sm:$0xff] %v1670
          %1712 = vst [vmem:[%s346 + $0xe0] sm:$0xff] %v1673
          %1713 = vst [vmem:[%s346 + $0xe8] sm:$0xff] %v1676
          %1714 = vst [vmem:[%s346 + $0xf0] sm:$0xff] %v1679
          %1715 = vst [vmem:[%s346 + $0xf8] sm:$0xff] %v1682
        $region68: #{tpu_custom_call.1} parent=43 // pred_fallthru
          _
        %s1716 = sand.u32 %s183, 1
        %s1717 = scalar_lea.sflag [#allocation5], %s1716
        %s1718 = sand.u32 %s183, 1
        %s1719 = smul.addr %s1718, 256
        %s1720 = scalar_lea.vmem [#allocation11], %s1719
        // Predicated region
        $region69: #{tpu_custom_call.1} parent=43 // pred_check
          %p1721 = pneg %p193
        $region70: #{tpu_custom_call.1} parent=43 // pred_check_branch
          %1723 = sbr.rel (%p1721) target = $region72
        $region71: #{tpu_custom_call.1} parent=43 // pred_region
          %s1724 = smul.u32 32, %s29
          %1726 = vsyncadd %s1717, 0
          %s1727 = smul.addr %s1724, 8
          %s1728 = scalar_lea.hbm %s6, %s1727
          %s1729 = sshll.u32 %s1720, 4
          %s1730 = int_to_ptr.vmem [resolvable:$true] %s1729
          %s1731 = sshll.u32 %s1728, 4
          %s1732 = int_to_ptr.hbm [resolvable:$true] %s1731
          %1737 = dma.vmem_to_hbm [thread:$0]  %s1730, 4096, %s1732, %s1717, 128, 128, 8
        $region72: #{tpu_custom_call.1} parent=43 // pred_fallthru
          _
      $region44: #{tpu_custom_call.1} parent=5 // pred_fallthru
        _
      %p1738 = scmp.le.s32.totalorder 2, %s20
      // Predicated region
      $region73: #{tpu_custom_call.1} parent=5 // pred_check
        %p1739 = pneg %p1738
      $region74: #{tpu_custom_call.1} parent=5 // pred_check_branch
        %1741 = sbr.rel (%p1739) target = $region76
      $region75: #{tpu_custom_call.1} parent=5 // pred_region
        %s1742 = ssub.s32 %s20, 2
        // Predicated region
        $region77: #{tpu_custom_call.1} parent=75 // pred_check
          %p1743 = pneg %p199
        $region78: #{tpu_custom_call.1} parent=75 // pred_check_branch
          %1745 = sbr.rel (%p1743) target = $region80
        $region79: #{tpu_custom_call.1} parent=75 // pred_region
          %s1746 = sand.u32 %s184, 1
          %s1747 = scalar_lea.sflag [#allocation5], %s1746
          %s1748 = sand.u32 %s184, 1
          %s1749 = smul.addr %s1748, 256
          %s1750 = scalar_lea.vmem [#allocation11], %s1749
          %1752 = dma.done %s1747, 4096
        $region80: #{tpu_custom_call.1} parent=75 // pred_fallthru
          _
      $region76: #{tpu_custom_call.1} parent=5 // pred_fallthru
        _
    $region6: #{tpu_custom_call.1} parent=1 // loop_footer
      %s24 = sadd.s32 1, %s20
    $region7: #{tpu_custom_call.1} parent=1 // loop_footer_branch
      %19 = sbr.rel target = $region3
    $region8: #{tpu_custom_call.1} parent=1 // loop_exit
      _
    %1753 = vsyncpa [#allocation4], 1
    %s1754 = scalar_lea.sflag [#allocation4], 1
    %1755 = vsyncpa %s1754, 1
    %1756 = vsyncpa [#allocation7], 1
    %1757 = vsyncpa [#allocation10], 1
    %1758 = vsyncpa [#allocation5], 1
    %s1759 = scalar_lea.sflag [#allocation5], 1
    %1760 = vsyncpa %s1759, 1

</llo_original>
